<compile_context>
chip_gen: v6e
topology: v6e:2x2x1
jax: 0.10.0
libtpu: 0.0.40
codegen_flags: <defaults>
</compile_context>

<pallas_src>
import functools

import jax
import jax.numpy as jnp
from jax.experimental import pallas as pl
from jax.experimental.pallas import tpu as pltpu

# ----------------------------- model configuration ---------------------------
VOCAB_SIZE = 100
EMBED_DIM = 32
N_FILTERS = 8
FILTER_SIZES = (3, 4, 5)
OUTPUT_DIM = 2
SEQ_LEN = 16

# ----------------------------- kernel configuration --------------------------
V_PAD = 128                      # vocab padded to 128 lanes (one-hot gather K)
MAX_FS = max(FILTER_SIZES)       # 5 taps actually used (no dead taps)
C_PAD = 128                      # conv output channels padded to 128 lanes
OUT_PAD = 128                    # FC output padded to 128 lanes
B_TILE = 16                      # samples per grid step -> 256 conv rows / step
PAD_ROWS = 8                     # sentinel rows per tile (>= MAX_FS-1, mult. of 8)

assert C_PAD >= len(FILTER_SIZES) * N_FILTERS
assert V_PAD >= VOCAB_SIZE
assert PAD_ROWS >= MAX_FS - 1 and PAD_ROWS % 8 == 0
assert (B_TILE * SEQ_LEN) % 8 == 0


# --------------------------------- kernel -------------------------------------
def _cnn_kernel(b_tile, seq_len,
                ids_ref, table_ref, wc_ref, bc_ref, mask_ref, fcw_ref, fcb_ref,
                out_ref):
    bl = b_tile * seq_len
    rows = ids_ref.shape[0]                       # bl + PAD_ROWS

    # 1. Embedding gather as one MXU matmul: one-hot(ids) @ table_pad.
    #    Sentinel id -1 (batch / tap padding) matches no lane -> zero emb row,
    #    so this directly emits the tap-padded embedding slab.
    ids = ids_ref[...]                                              # [rows, 1] i32
    v_iota = jax.lax.broadcasted_iota(jnp.int32, (rows, V_PAD), 1)
    onehot = (v_iota == ids).astype(jnp.float32)                    # [rows, V_PAD]
    emb = jnp.dot(onehot, table_ref[...],
                  preferred_element_type=jnp.float32)               # [rows, E]

    # 2. All filter sizes fused, as accumulated per-tap matmuls (no im2col slab):
    #    conv[r, c] = sum_k emb[r + k, :] @ wc[k*E:(k+1)*E, c].
    #    Weight row slices are 8-sublane aligned (E = 32).
    wc = wc_ref[...]                                                # [MAX_FS*E, C_PAD]
    conv = jnp.dot(emb[0:bl, :], wc[0:EMBED_DIM, :],
                   preferred_element_type=jnp.float32)
    for k in range(1, MAX_FS):
        conv += jnp.dot(emb[k:k + bl, :],
                        wc[k * EMBED_DIM:(k + 1) * EMBED_DIM, :],
                        preferred_element_type=jnp.float32)
    conv = jnp.maximum(conv + bc_ref[...], 0.0)                     # [bl, C_PAD]

    # 3. Mask conv positions whose window runs past the sample end (also kills
    #    cross-sample leakage from the tap shifts).  Exact because values are
    #    post-ReLU (>= 0) and padded channels carry zero weight/bias.
    masked = conv.reshape(b_tile, seq_len, C_PAD) * mask_ref[...]   # [b,L,C_PAD]

    # 4. Max-pool over time, then FC head (lane-dense, pre-transposed weights).
    pooled = jnp.max(masked, axis=1)                                # [b, C_PAD]
    out_ref[...] = (jnp.dot(pooled, fcw_ref[...],
                            preferred_element_type=jnp.float32) + fcb_ref[...])


# --------------------------- host-side packing ---------------------------------
def pack_params(params):
    """Pre-transpose / fuse / lane-pad all constants (trace-time, free)."""
    table_pad = jnp.zeros((V_PAD, EMBED_DIM), jnp.float32)
    table_pad = table_pad.at[:VOCAB_SIZE].set(params["embedding"])

    # Fused conv weights: wc[k*E + e, f_global] = w_fs[f, k, e].
    w_fused = jnp.zeros((MAX_FS * EMBED_DIM, C_PAD), jnp.float32)
    b_fused = jnp.zeros((1, C_PAD), jnp.float32)
    for g, fs in enumerate(FILTER_SIZES):
        w = params[f"conv{fs}_w"]                                   # [n_f, fs, E]
        w_t = jnp.transpose(w, (1, 2, 0)).reshape(fs * EMBED_DIM, N_FILTERS)
        c0 = g * N_FILTERS
        w_fused = w_fused.at[:fs * EMBED_DIM, c0:c0 + N_FILTERS].set(w_t)
        b_fused = b_fused.at[0, c0:c0 + N_FILTERS].set(params[f"conv{fs}_b"])

    n_real = len(FILTER_SIZES) * N_FILTERS
    fc_w_pad = jnp.zeros((C_PAD, OUT_PAD), jnp.float32)
    fc_w_pad = fc_w_pad.at[:n_real, :OUTPUT_DIM].set(params["fc_w"].T)
    fc_b_pad = jnp.zeros((1, OUT_PAD), jnp.float32)
    fc_b_pad = fc_b_pad.at[0, :OUTPUT_DIM].set(params["fc_b"])

    # Time-validity mask [SEQ_LEN, C_PAD]: 1 where the conv window fits.
    t = jnp.arange(SEQ_LEN, dtype=jnp.int32)[:, None]
    c = jnp.arange(C_PAD, dtype=jnp.int32)[None, :]
    valid_len = jnp.full((SEQ_LEN, C_PAD), SEQ_LEN, jnp.int32)
    for g, fs in enumerate(FILTER_SIZES):
        in_grp = (c >= g * N_FILTERS) & (c < (g + 1) * N_FILTERS)
        valid_len = jnp.where(in_grp, SEQ_LEN - fs + 1, valid_len)
    mask = (t < valid_len).astype(jnp.float32)

    return dict(table=table_pad, w_conv=w_fused, b_conv=b_fused, mask=mask,
                fc_w=fc_w_pad, fc_b=fc_b_pad)


# ---------------------------------- wrapper ------------------------------------
def cnn_classifier_forward(input_ids, packed):
    """input_ids: [B, L] int32. Returns logits [B, OUTPUT_DIM] float32."""
    B, L = input_ids.shape
    assert L == SEQ_LEN
    num_tiles = int(pl.cdiv(B, B_TILE))
    b_pad = num_tiles * B_TILE
    rows = B_TILE * L + PAD_ROWS

    # Pad batch to a multiple of B_TILE and append PAD_ROWS sentinel ids (-1)
    # to every tile so the per-tap shifts in the kernel read zero embeddings.
    ids = jnp.full((b_pad, L), -1, jnp.int32).at[:B].set(input_ids.astype(jnp.int32))
    ids = ids.reshape(num_tiles, B_TILE * L)
    ids = jnp.concatenate(
        [ids, jnp.full((num_tiles, PAD_ROWS), -1, jnp.int32)], axis=1)
    ids_col = ids.reshape(num_tiles * rows, 1)

    vmem = pltpu.MemorySpace.VMEM

    def const_spec(shape):
        # Constant index_map -> weights are DMA'd once and stay VMEM-resident.
        return pl.BlockSpec(shape, lambda i: (0, 0), memory_space=vmem)

    out_pad = pl.pallas_call(
        functools.partial(_cnn_kernel, B_TILE, L),
        out_shape=jax.ShapeDtypeStruct((b_pad, OUT_PAD), jnp.float32),
        grid=(num_tiles,),
        in_specs=[
            pl.BlockSpec((rows, 1), lambda i: (i, 0), memory_space=vmem),  # ids
            const_spec((V_PAD, EMBED_DIM)),                                # table
            const_spec((MAX_FS * EMBED_DIM, C_PAD)),                       # w_conv
            const_spec((1, C_PAD)),                                        # b_conv
            const_spec((SEQ_LEN, C_PAD)),                                  # mask
            const_spec((C_PAD, OUT_PAD)),                                  # fc_w
            const_spec((1, OUT_PAD)),                                      # fc_b
        ],
        out_specs=pl.BlockSpec((B_TILE, OUT_PAD), lambda i: (i, 0),
                               memory_space=vmem),
        compiler_params=pltpu.CompilerParams(
            dimension_semantics=("parallel",)),
    )(ids_col, packed["table"], packed["w_conv"], packed["b_conv"],
      packed["mask"], packed["fc_w"], packed["fc_b"])
    return out_pad[:B, :OUTPUT_DIM]


# ------------------------- deterministic params ---------------------------------
def init_params(key):
    keys = jax.random.split(key, 3 + 2 * len(FILTER_SIZES))
    params = {
        "embedding": jax.random.normal(
            keys[0], (VOCAB_SIZE, EMBED_DIM), jnp.float32) * 0.1,
        "fc_w": jax.random.normal(
            keys[1], (OUTPUT_DIM, len(FILTER_SIZES) * N_FILTERS),
            jnp.float32) * 0.1,
        "fc_b": jax.random.normal(keys[2], (OUTPUT_DIM,), jnp.float32) * 0.1,
    }
    for i, fs in enumerate(FILTER_SIZES):
        params[f"conv{fs}_w"] = jax.random.normal(
            keys[3 + 2 * i], (N_FILTERS, fs, EMBED_DIM), jnp.float32) * 0.1
        params[f"conv{fs}_b"] = jax.random.normal(
            keys[4 + 2 * i], (N_FILTERS,), jnp.float32) * 0.1
    return params


# --------------------------------- reference ------------------------------------
def reference_forward(input_ids, params):
    emb = jnp.take(params["embedding"], input_ids, axis=0)          # [B, L, E]
    pooled = []
    for fs in FILTER_SIZES:
        L_out = emb.shape[1] - fs + 1
        windows = jnp.stack(
            [emb[:, k:k + L_out, :] for k in range(fs)], axis=2)    # [B, L_out, fs, E]
        conv = jnp.einsum("blke,fke->blf", windows, params[f"conv{fs}_w"])
        conv = conv + params[f"conv{fs}_b"]
        conv = jnp.maximum(conv, 0.0)
        pooled.append(jnp.max(conv, axis=1))                        # [B, n_f]
    cat = jnp.concatenate(pooled, axis=1)
    return cat @ params["fc_w"].T + params["fc_b"]                  # dropout = id


# ----------------------------------- main ----------------------------------------
if __name__ == "__main__":
    key = jax.random.PRNGKey(0)
    k_ids, k_params = jax.random.split(key)

    BATCH = 20   # not a multiple of B_TILE: exercises both the grid (2 steps)
                 # and the sentinel-padding path.
    input_ids = jax.random.randint(
        k_ids, (BATCH, SEQ_LEN), 0, VOCAB_SIZE, dtype=jnp.int32)
    params = init_params(k_params)
    packed = pack_params(params)

    logits = cnn_classifier_forward(input_ids, packed)
    logits = jax.block_until_ready(logits)

    ref = reference_forward(input_ids, params)
    assert logits.shape == (BATCH, OUTPUT_DIM)
    assert jnp.allclose(logits, ref, atol=1e-4, rtol=1e-4), (logits, ref)

    print("KERNEL_OK")
</pallas_src>

<mosaic_0001>
module attributes {stable_mosaic.version = 11 : i64} {
  func.func @_cnn_kernel(%arg0: i32, %arg1: memref<264x1xi32, #tpu.memory_space<vmem>>, %arg2: memref<128x32xf32, #tpu.memory_space<vmem>>, %arg3: memref<160x128xf32, #tpu.memory_space<vmem>>, %arg4: memref<1x128xf32, #tpu.memory_space<vmem>>, %arg5: memref<16x128xf32, #tpu.memory_space<vmem>>, %arg6: memref<128x128xf32, #tpu.memory_space<vmem>>, %arg7: memref<1x128xf32, #tpu.memory_space<vmem>>, %arg8: memref<16x128xf32, #tpu.memory_space<vmem>>) attributes {dimension_semantics = [#tpu.dimension_semantics<parallel>], iteration_bounds = array<i64: 2>, scalar_prefetch = 0 : i64, scratch_operands = 0 : i64, tpu.core_type = #tpu.core_type<tc>, window_params = [{transform_indices = @transform_0, window_bounds = array<i64: 264, 1>}, {pipeline_mode = #tpu.pipeline_mode<synchronous>, transform_indices = @transform_1, window_bounds = array<i64: 128, 32>}, {pipeline_mode = #tpu.pipeline_mode<synchronous>, transform_indices = @transform_2, window_bounds = array<i64: 160, 128>}, {pipeline_mode = #tpu.pipeline_mode<synchronous>, transform_indices = @transform_3, window_bounds = array<i64: 1, 128>}, {pipeline_mode = #tpu.pipeline_mode<synchronous>, transform_indices = @transform_4, window_bounds = array<i64: 16, 128>}, {pipeline_mode = #tpu.pipeline_mode<synchronous>, transform_indices = @transform_5, window_bounds = array<i64: 128, 128>}, {pipeline_mode = #tpu.pipeline_mode<synchronous>, transform_indices = @transform_6, window_bounds = array<i64: 1, 128>}, {transform_indices = @transform_7, window_bounds = array<i64: 16, 128>}]} {
    %c0 = arith.constant 0 : index
    %c0_0 = arith.constant 0 : index
    %0 = vector.load %arg1[%c0, %c0_0] : memref<264x1xi32, #tpu.memory_space<vmem>>, vector<264x1xi32>
    %1 = tpu.iota {dimensions = array<i32: 1>} : vector<264x128xi32>
    %2 = vector.broadcast %0 : vector<264x1xi32> to vector<264x128xi32>
    %3 = arith.cmpi eq, %1, %2 : vector<264x128xi32>
    %4 = arith.extui %3 : vector<264x128xi1> to vector<264x128xi32>
    %5 = arith.sitofp %4 : vector<264x128xi32> to vector<264x128xf32>
    %c0_1 = arith.constant 0 : index
    %c0_2 = arith.constant 0 : index
    %6 = vector.load %arg2[%c0_1, %c0_2] : memref<128x32xf32, #tpu.memory_space<vmem>>, vector<128x32xf32>
    %cst = arith.constant dense<0.000000e+00> : vector<264x32xf32>
    %7 = tpu.matmul %5, %6, %cst {dimension_numbers = #tpu.dot_dimension_numbers<[1], [0], [0], [1], [0, 0, 1, 1], [], []>} : vector<264x128xf32>, vector<128x32xf32>, vector<264x32xf32> -> vector<264x32xf32>
    %c0_3 = arith.constant 0 : index
    %c0_4 = arith.constant 0 : index
    %8 = vector.load %arg3[%c0_3, %c0_4] : memref<160x128xf32, #tpu.memory_space<vmem>>, vector<160x128xf32>
    %9 = vector.extract_strided_slice %7 {offsets = [0, 0], sizes = [256, 32], strides = [1, 1]} : vector<264x32xf32> to vector<256x32xf32>
    %10 = vector.extract_strided_slice %8 {offsets = [0, 0], sizes = [32, 128], strides = [1, 1]} : vector<160x128xf32> to vector<32x128xf32>
    %cst_5 = arith.constant dense<0.000000e+00> : vector<256x128xf32>
    %11 = tpu.matmul %9, %10, %cst_5 {dimension_numbers = #tpu.dot_dimension_numbers<[1], [0], [0], [1], [0, 0, 1, 1], [], []>} : vector<256x32xf32>, vector<32x128xf32>, vector<256x128xf32> -> vector<256x128xf32>
    %12 = vector.extract_strided_slice %7 {offsets = [1, 0], sizes = [256, 32], strides = [1, 1]} : vector<264x32xf32> to vector<256x32xf32>
    %13 = vector.extract_strided_slice %8 {offsets = [32, 0], sizes = [32, 128], strides = [1, 1]} : vector<160x128xf32> to vector<32x128xf32>
    %cst_6 = arith.constant dense<0.000000e+00> : vector<256x128xf32>
    %14 = tpu.matmul %12, %13, %cst_6 {dimension_numbers = #tpu.dot_dimension_numbers<[1], [0], [0], [1], [0, 0, 1, 1], [], []>} : vector<256x32xf32>, vector<32x128xf32>, vector<256x128xf32> -> vector<256x128xf32>
    %15 = arith.addf %11, %14 : vector<256x128xf32>
    %16 = vector.extract_strided_slice %7 {offsets = [2, 0], sizes = [256, 32], strides = [1, 1]} : vector<264x32xf32> to vector<256x32xf32>
    %17 = vector.extract_strided_slice %8 {offsets = [64, 0], sizes = [32, 128], strides = [1, 1]} : vector<160x128xf32> to vector<32x128xf32>
    %cst_7 = arith.constant dense<0.000000e+00> : vector<256x128xf32>
    %18 = tpu.matmul %16, %17, %cst_7 {dimension_numbers = #tpu.dot_dimension_numbers<[1], [0], [0], [1], [0, 0, 1, 1], [], []>} : vector<256x32xf32>, vector<32x128xf32>, vector<256x128xf32> -> vector<256x128xf32>
    %19 = arith.addf %15, %18 : vector<256x128xf32>
    %20 = vector.extract_strided_slice %7 {offsets = [3, 0], sizes = [256, 32], strides = [1, 1]} : vector<264x32xf32> to vector<256x32xf32>
    %21 = vector.extract_strided_slice %8 {offsets = [96, 0], sizes = [32, 128], strides = [1, 1]} : vector<160x128xf32> to vector<32x128xf32>
    %cst_8 = arith.constant dense<0.000000e+00> : vector<256x128xf32>
    %22 = tpu.matmul %20, %21, %cst_8 {dimension_numbers = #tpu.dot_dimension_numbers<[1], [0], [0], [1], [0, 0, 1, 1], [], []>} : vector<256x32xf32>, vector<32x128xf32>, vector<256x128xf32> -> vector<256x128xf32>
    %23 = arith.addf %19, %22 : vector<256x128xf32>
    %24 = vector.extract_strided_slice %7 {offsets = [4, 0], sizes = [256, 32], strides = [1, 1]} : vector<264x32xf32> to vector<256x32xf32>
    %25 = vector.extract_strided_slice %8 {offsets = [128, 0], sizes = [32, 128], strides = [1, 1]} : vector<160x128xf32> to vector<32x128xf32>
    %cst_9 = arith.constant dense<0.000000e+00> : vector<256x128xf32>
    %26 = tpu.matmul %24, %25, %cst_9 {dimension_numbers = #tpu.dot_dimension_numbers<[1], [0], [0], [1], [0, 0, 1, 1], [], []>} : vector<256x32xf32>, vector<32x128xf32>, vector<256x128xf32> -> vector<256x128xf32>
    %27 = arith.addf %23, %26 : vector<256x128xf32>
    %c0_10 = arith.constant 0 : index
    %c0_11 = arith.constant 0 : index
    %28 = vector.load %arg4[%c0_10, %c0_11] : memref<1x128xf32, #tpu.memory_space<vmem>>, vector<1x128xf32>
    %29 = vector.broadcast %28 : vector<1x128xf32> to vector<256x128xf32>
    %30 = arith.addf %27, %29 : vector<256x128xf32>
    %cst_12 = arith.constant 0.000000e+00 : f32
    %31 = vector.broadcast %cst_12 : f32 to vector<256x128xf32>
    %32 = arith.maximumf %30, %31 : vector<256x128xf32>
    %33 = vector.shape_cast %32 : vector<256x128xf32> to vector<16x16x128xf32>
    %c0_13 = arith.constant 0 : index
    %c0_14 = arith.constant 0 : index
    %34 = vector.load %arg5[%c0_13, %c0_14] : memref<16x128xf32, #tpu.memory_space<vmem>>, vector<16x128xf32>
    %35 = vector.shape_cast %34 : vector<16x128xf32> to vector<1x16x128xf32>
    %36 = vector.broadcast %35 : vector<1x16x128xf32> to vector<16x16x128xf32>
    %37 = arith.mulf %33, %36 : vector<16x16x128xf32>
    %cst_15 = arith.constant dense<0xFF800000> : vector<16x128xf32>
    %38 = vector.multi_reduction <maximumf>, %37, %cst_15 [1] : vector<16x16x128xf32> to vector<16x128xf32>
    %c0_16 = arith.constant 0 : index
    %c0_17 = arith.constant 0 : index
    %39 = vector.load %arg6[%c0_16, %c0_17] : memref<128x128xf32, #tpu.memory_space<vmem>>, vector<128x128xf32>
    %cst_18 = arith.constant dense<0.000000e+00> : vector<16x128xf32>
    %40 = tpu.matmul %38, %39, %cst_18 {dimension_numbers = #tpu.dot_dimension_numbers<[1], [0], [0], [1], [0, 0, 1, 1], [], []>} : vector<16x128xf32>, vector<128x128xf32>, vector<16x128xf32> -> vector<16x128xf32>
    %c0_19 = arith.constant 0 : index
    %c0_20 = arith.constant 0 : index
    %41 = vector.load %arg7[%c0_19, %c0_20] : memref<1x128xf32, #tpu.memory_space<vmem>>, vector<1x128xf32>
    %42 = vector.broadcast %41 : vector<1x128xf32> to vector<16x128xf32>
    %43 = arith.addf %40, %42 : vector<16x128xf32>
    %c0_21 = arith.constant 0 : index
    %c0_22 = arith.constant 0 : index
    %44 = vector.load %arg8[%c0_21, %c0_22] : memref<16x128xf32, #tpu.memory_space<vmem>>, vector<16x128xf32>
    tpu.vector_store %arg8[%c0_21, %c0_22], %43 {strides = array<i32>} : memref<16x128xf32, #tpu.memory_space<vmem>>, vector<16x128xf32>,
    return
  }
  func.func @transform_0(%arg0: i32) -> (i32, i32) {
    %c0_i32 = arith.constant 0 : i32
    %c0_i32_0 = arith.constant 0 : i32
    return %arg0, %c0_i32 : i32, i32
  }
  func.func @transform_1(%arg0: i32) -> (i32, i32) {
    %c0_i32 = arith.constant 0 : i32
    %c0_i32_0 = arith.constant 0 : i32
    %c0_i32_1 = arith.constant 0 : i32
    return %c0_i32, %c0_i32_0 : i32, i32
  }
  func.func @transform_2(%arg0: i32) -> (i32, i32) {
    %c0_i32 = arith.constant 0 : i32
    %c0_i32_0 = arith.constant 0 : i32
    %c0_i32_1 = arith.constant 0 : i32
    return %c0_i32, %c0_i32_0 : i32, i32
  }
  func.func @transform_3(%arg0: i32) -> (i32, i32) {
    %c0_i32 = arith.constant 0 : i32
    %c0_i32_0 = arith.constant 0 : i32
    %c0_i32_1 = arith.constant 0 : i32
    return %c0_i32, %c0_i32_0 : i32, i32
  }
  func.func @transform_4(%arg0: i32) -> (i32, i32) {
    %c0_i32 = arith.constant 0 : i32
    %c0_i32_0 = arith.constant 0 : i32
    %c0_i32_1 = arith.constant 0 : i32
    return %c0_i32, %c0_i32_0 : i32, i32
  }
  func.func @transform_5(%arg0: i32) -> (i32, i32) {
    %c0_i32 = arith.constant 0 : i32
    %c0_i32_0 = arith.constant 0 : i32
    %c0_i32_1 = arith.constant 0 : i32
    return %c0_i32, %c0_i32_0 : i32, i32
  }
  func.func @transform_6(%arg0: i32) -> (i32, i32) {
    %c0_i32 = arith.constant 0 : i32
    %c0_i32_0 = arith.constant 0 : i32
    %c0_i32_1 = arith.constant 0 : i32
    return %c0_i32, %c0_i32_0 : i32, i32
  }
  func.func @transform_7(%arg0: i32) -> (i32, i32) {
    %c0_i32 = arith.constant 0 : i32
    %c0_i32_0 = arith.constant 0 : i32
    return %arg0, %c0_i32 : i32, i32
  }
}

</mosaic_0001>

<llo_original>
// kernel: tpu_custom_call.1
$region0: #{tpu_custom_call.1}
  #allocation0 [shape = 'u32[]', space=smem, size = 0x4, offset = 0x4, fixed_abs, tag = 'smem constant byte address 0x4 - core index']
  #allocation1 [shape = 'u32[144,128]{1,0:T(1,128)}', space=vmem, size = 0x12000, scoped, tag = 'internal scratch']
  %s0 = inlined_call_operand.vmem [shape: s32[528,1], index: 0, kind: input, shape index: {}]
  %s1 = inlined_call_operand.vmem [shape: f32[128,32], index: 1, kind: input, shape index: {}]
  %s2 = inlined_call_operand.vmem [shape: f32[160,128], index: 2, kind: input, shape index: {}]
  %s3 = inlined_call_operand.vmem [shape: f32[1,128], index: 3, kind: input, shape index: {}]
  %s4 = inlined_call_operand.vmem [shape: f32[16,128], index: 4, kind: input, shape index: {}]
  %s5 = inlined_call_operand.vmem [shape: f32[128,128], index: 5, kind: input, shape index: {}]
  %s6 = inlined_call_operand.vmem [shape: f32[1,128], index: 6, kind: input, shape index: {}]
  %s7 = inlined_call_operand.hbm [shape: f32[32,128], index: 7, kind: output, shape index: {}]
  %s8 = sld [smem:[#allocation0]]
  $region61: #{tpu_custom_call.1} parent=0
    _
  %s10 = ssub.s32 1, %s8
  %s11 = scalar_select 0, %s10, %s8
  $region1: #{tpu_custom_call.1} parent=0
    #allocation2 [shape = 'u8[16384]{0}', space=vmem, size = 0x4000, scoped, tag = 'output window, operand 0']
    #allocation3 [shape = 's32[2]{0}', space=sflag, size = 0x8, scoped, tag = 'scoped memory for tpu_custom_call.1']
    %12 = vsyncpa [#allocation3], 0
    %s13 = scalar_lea.sflag [#allocation3], 1
    %14 = vsyncpa %s13, 0
    loop: start=0, step=1, limit=4
    $region2: #{tpu_custom_call.1} parent=1 // loop_pre_header
      _
    $region3: #{tpu_custom_call.1} parent=1 // loop_header
      %s16 = sphi 0, %s20
      %p17 = scmp.ge.s32.totalorder %s16, 4
      %s26 = sphi 0, %s28
      %s29 = sphi 0, %s26
      %s30 = sphi 0, %s29
      %s46 = sphi 0, %s30
      %s50 = sphi 0, %s50
      %s52 = sphi 0, %s50
      %s53 = sphi 0, %s52
      %s67 = sphi 0, %s53
      %s71 = sphi 0, %s71
      %s73 = sphi 0, %s71
      %s74 = sphi 0, %s73
      %s88 = sphi 0, %s74
      %s92 = sphi 0, %s92
      %s94 = sphi 0, %s92
      %s95 = sphi 0, %s94
      %s109 = sphi 0, %s95
      %s113 = sphi 0, %s113
      %s115 = sphi 0, %s113
      %s116 = sphi 0, %s115
      %s130 = sphi 0, %s116
      %s134 = sphi 0, %s134
      %s136 = sphi 0, %s134
      %s137 = sphi 0, %s136
      %s151 = sphi 0, %s137
      %s155 = sphi 0, %s155
      %s157 = sphi 0, %s155
      %s158 = sphi 0, %s157
      %s172 = sphi 0, %s158
      %s178 = sphi 0, %s180
      %s181 = sphi 0, %s178
      %s182 = sphi 0, %s181
      %s198 = sphi 0, %s182
    $region4: #{tpu_custom_call.1} parent=1 // loop_header_branch
      %19 = sbr.rel (%p17) target = $region8
    $region5: #{tpu_custom_call.1} parent=1 // loop_body
      %s21 = ssub.s32 %s16, 1
      %s22 = ssub.s32 %s16, 2
      %s23 = sadd.s32 %s16, 1
      %s24 = ssub.s32 %s16, %s23
      %p25 = scmp.eq.s32.totalorder %s24, 0
      %s27 = sadd.s32 %s26, 1
      %s28 = scalar_select %p25, %s26, %s27
      %p31 = pneg %p25
      %p32 = scmp.eq.s32.totalorder %s16, 1
      %p33 = por %p31, %p32
      %p34 = scmp.ne.s32.totalorder %s26, %s29
      %p35 = scmp.eq.s32.totalorder %s16, 0
      %p36 = por %p34, %p35
      %p37 = scmp.ne.s32.totalorder %s26, %s29
      %p38 = scmp.eq.s32.totalorder %s21, 1
      %p39 = por %p37, %p38
      %p40 = scmp.ne.s32.totalorder %s29, %s30
      %p41 = scmp.eq.s32.totalorder %s21, 0
      %p42 = por %p40, %p41
      %p43 = scmp.ne.s32.totalorder %s29, %s30
      %p44 = scmp.eq.s32.totalorder %s22, 1
      %p45 = por %p43, %p44
      %p47 = scmp.ne.s32.totalorder %s30, %s46
      %p48 = scmp.eq.s32.totalorder %s22, 0
      %p49 = por %p47, %p48
      %s51 = sadd.s32 %s50, 1
      %p54 = scmp.eq.s32.totalorder %s16, 1
      %p55 = scmp.ne.s32.totalorder %s50, %s52
      %p56 = scmp.eq.s32.totalorder %s16, 0
      %p57 = por %p55, %p56
      %p58 = scmp.ne.s32.totalorder %s50, %s52
      %p59 = scmp.eq.s32.totalorder %s21, 1
      %p60 = por %p58, %p59
      %p61 = scmp.ne.s32.totalorder %s52, %s53
      %p62 = scmp.eq.s32.totalorder %s21, 0
      %p63 = por %p61, %p62
      %p64 = scmp.ne.s32.totalorder %s52, %s53
      %p65 = scmp.eq.s32.totalorder %s22, 1
      %p66 = por %p64, %p65
      %p68 = scmp.ne.s32.totalorder %s53, %s67
      %p69 = scmp.eq.s32.totalorder %s22, 0
      %p70 = por %p68, %p69
      %s72 = sadd.s32 %s71, 1
      %p75 = scmp.eq.s32.totalorder %s16, 1
      %p76 = scmp.ne.s32.totalorder %s71, %s73
      %p77 = scmp.eq.s32.totalorder %s16, 0
      %p78 = por %p76, %p77
      %p79 = scmp.ne.s32.totalorder %s71, %s73
      %p80 = scmp.eq.s32.totalorder %s21, 1
      %p81 = por %p79, %p80
      %p82 = scmp.ne.s32.totalorder %s73, %s74
      %p83 = scmp.eq.s32.totalorder %s21, 0
      %p84 = por %p82, %p83
      %p85 = scmp.ne.s32.totalorder %s73, %s74
      %p86 = scmp.eq.s32.totalorder %s22, 1
      %p87 = por %p85, %p86
      %p89 = scmp.ne.s32.totalorder %s74, %s88
      %p90 = scmp.eq.s32.totalorder %s22, 0
      %p91 = por %p89, %p90
      %s93 = sadd.s32 %s92, 1
      %p96 = scmp.eq.s32.totalorder %s16, 1
      %p97 = scmp.ne.s32.totalorder %s92, %s94
      %p98 = scmp.eq.s32.totalorder %s16, 0
      %p99 = por %p97, %p98
      %p100 = scmp.ne.s32.totalorder %s92, %s94
      %p101 = scmp.eq.s32.totalorder %s21, 1
      %p102 = por %p100, %p101
      %p103 = scmp.ne.s32.totalorder %s94, %s95
      %p104 = scmp.eq.s32.totalorder %s21, 0
      %p105 = por %p103, %p104
      %p106 = scmp.ne.s32.totalorder %s94, %s95
      %p107 = scmp.eq.s32.totalorder %s22, 1
      %p108 = por %p106, %p107
      %p110 = scmp.ne.s32.totalorder %s95, %s109
      %p111 = scmp.eq.s32.totalorder %s22, 0
      %p112 = por %p110, %p111
      %s114 = sadd.s32 %s113, 1
      %p117 = scmp.eq.s32.totalorder %s16, 1
      %p118 = scmp.ne.s32.totalorder %s113, %s115
      %p119 = scmp.eq.s32.totalorder %s16, 0
      %p120 = por %p118, %p119
      %p121 = scmp.ne.s32.totalorder %s113, %s115
      %p122 = scmp.eq.s32.totalorder %s21, 1
      %p123 = por %p121, %p122
      %p124 = scmp.ne.s32.totalorder %s115, %s116
      %p125 = scmp.eq.s32.totalorder %s21, 0
      %p126 = por %p124, %p125
      %p127 = scmp.ne.s32.totalorder %s115, %s116
      %p128 = scmp.eq.s32.totalorder %s22, 1
      %p129 = por %p127, %p128
      %p131 = scmp.ne.s32.totalorder %s116, %s130
      %p132 = scmp.eq.s32.totalorder %s22, 0
      %p133 = por %p131, %p132
      %s135 = sadd.s32 %s134, 1
      %p138 = scmp.eq.s32.totalorder %s16, 1
      %p139 = scmp.ne.s32.totalorder %s134, %s136
      %p140 = scmp.eq.s32.totalorder %s16, 0
      %p141 = por %p139, %p140
      %p142 = scmp.ne.s32.totalorder %s134, %s136
      %p143 = scmp.eq.s32.totalorder %s21, 1
      %p144 = por %p142, %p143
      %p145 = scmp.ne.s32.totalorder %s136, %s137
      %p146 = scmp.eq.s32.totalorder %s21, 0
      %p147 = por %p145, %p146
      %p148 = scmp.ne.s32.totalorder %s136, %s137
      %p149 = scmp.eq.s32.totalorder %s22, 1
      %p150 = por %p148, %p149
      %p152 = scmp.ne.s32.totalorder %s137, %s151
      %p153 = scmp.eq.s32.totalorder %s22, 0
      %p154 = por %p152, %p153
      %s156 = sadd.s32 %s155, 1
      %p159 = scmp.eq.s32.totalorder %s16, 1
      %p160 = scmp.ne.s32.totalorder %s155, %s157
      %p161 = scmp.eq.s32.totalorder %s16, 0
      %p162 = por %p160, %p161
      %p163 = scmp.ne.s32.totalorder %s155, %s157
      %p164 = scmp.eq.s32.totalorder %s21, 1
      %p165 = por %p163, %p164
      %p166 = scmp.ne.s32.totalorder %s157, %s158
      %p167 = scmp.eq.s32.totalorder %s21, 0
      %p168 = por %p166, %p167
      %p169 = scmp.ne.s32.totalorder %s157, %s158
      %p170 = scmp.eq.s32.totalorder %s22, 1
      %p171 = por %p169, %p170
      %p173 = scmp.ne.s32.totalorder %s158, %s172
      %p174 = scmp.eq.s32.totalorder %s22, 0
      %p175 = por %p173, %p174
      %s176 = ssub.s32 %s16, %s23
      %p177 = scmp.eq.s32.totalorder %s176, 0
      %s179 = sadd.s32 %s178, 1
      %s180 = scalar_select %p177, %s178, %s179
      %p183 = pneg %p177
      %p184 = scmp.eq.s32.totalorder %s16, 1
      %p185 = por %p183, %p184
      %p186 = scmp.ne.s32.totalorder %s178, %s181
      %p187 = scmp.eq.s32.totalorder %s16, 0
      %p188 = por %p186, %p187
      %p189 = scmp.ne.s32.totalorder %s178, %s181
      %p190 = scmp.eq.s32.totalorder %s21, 1
      %p191 = por %p189, %p190
      %p192 = scmp.ne.s32.totalorder %s181, %s182
      %p193 = scmp.eq.s32.totalorder %s21, 0
      %p194 = por %p192, %p193
      %p195 = scmp.ne.s32.totalorder %s181, %s182
      %p196 = scmp.eq.s32.totalorder %s22, 1
      %p197 = por %p195, %p196
      %p199 = scmp.ne.s32.totalorder %s182, %s198
      %p200 = scmp.eq.s32.totalorder %s22, 0
      %p201 = por %p199, %p200
      %p202 = scmp.le.s32.totalorder 1, %s16
      %p203 = scmp.lt.s32.totalorder %s16, 3
      %p204 = pnand %p202, %p203
      %p205 = pneg %p204
      // Predicated region
      $region9: #{tpu_custom_call.1} parent=5 // pred_check
        _
      $region10: #{tpu_custom_call.1} parent=5 // pred_check_branch
        %207 = sbr.rel (%p204) target = $region12
      $region11: #{tpu_custom_call.1} parent=5 // pred_region
        %s208 = ssub.s32 %s16, 1
        // Predicated region
        $region13: #{tpu_custom_call.1} parent=11 // pred_check
          %p209 = pneg %p63
        $region14: #{tpu_custom_call.1} parent=11 // pred_check_branch
          %211 = sbr.rel (%p209) target = $region16
        $region15: #{tpu_custom_call.1} parent=11 // pred_region
          _
        $region16: #{tpu_custom_call.1} parent=11 // pred_fallthru
          _
        // Predicated region
        $region17: #{tpu_custom_call.1} parent=11 // pred_check
          %p212 = pneg %p84
        $region18: #{tpu_custom_call.1} parent=11 // pred_check_branch
          %214 = sbr.rel (%p212) target = $region20
        $region19: #{tpu_custom_call.1} parent=11 // pred_region
          _
        $region20: #{tpu_custom_call.1} parent=11 // pred_fallthru
          _
        // Predicated region
        $region21: #{tpu_custom_call.1} parent=11 // pred_check
          %p215 = pneg %p105
        $region22: #{tpu_custom_call.1} parent=11 // pred_check_branch
          %217 = sbr.rel (%p215) target = $region24
        $region23: #{tpu_custom_call.1} parent=11 // pred_region
          _
        $region24: #{tpu_custom_call.1} parent=11 // pred_fallthru
          _
        // Predicated region
        $region25: #{tpu_custom_call.1} parent=11 // pred_check
          %p218 = pneg %p126
        $region26: #{tpu_custom_call.1} parent=11 // pred_check_branch
          %220 = sbr.rel (%p218) target = $region28
        $region27: #{tpu_custom_call.1} parent=11 // pred_region
          _
        $region28: #{tpu_custom_call.1} parent=11 // pred_fallthru
          _
        // Predicated region
        $region29: #{tpu_custom_call.1} parent=11 // pred_check
          %p221 = pneg %p147
        $region30: #{tpu_custom_call.1} parent=11 // pred_check_branch
          %223 = sbr.rel (%p221) target = $region32
        $region31: #{tpu_custom_call.1} parent=11 // pred_region
          _
        $region32: #{tpu_custom_call.1} parent=11 // pred_fallthru
          _
        // Predicated region
        $region33: #{tpu_custom_call.1} parent=11 // pred_check
          %p224 = pneg %p168
        $region34: #{tpu_custom_call.1} parent=11 // pred_check_branch
          %226 = sbr.rel (%p224) target = $region36
        $region35: #{tpu_custom_call.1} parent=11 // pred_region
          _
        $region36: #{tpu_custom_call.1} parent=11 // pred_fallthru
          _
      $region12: #{tpu_custom_call.1} parent=5 // pred_fallthru
        _
      %p227 = scmp.lt.s32.totalorder %s16, 2
      // Predicated region
      $region37: #{tpu_custom_call.1} parent=5 // pred_check
        %p228 = pneg %p227
      $region38: #{tpu_custom_call.1} parent=5 // pred_check_branch
        %230 = sbr.rel (%p228) target = $region40
      $region39: #{tpu_custom_call.1} parent=5 // pred_region
        // Predicated region
        $region41: #{tpu_custom_call.1} parent=39 // pred_check
          %p231 = pneg %p36
        $region42: #{tpu_custom_call.1} parent=39 // pred_check_branch
          %233 = sbr.rel (%p231) target = $region44
        $region43: #{tpu_custom_call.1} parent=39 // pred_region
          %s234 = smul.u32 33, %s16
          %p235 = scmp.lt.s32.totalorder %s234, 65
          %s236 = scalar_select %p235, %s234, 65
          %s237 = smul.addr %s236, 8
          %s238 = scalar_lea.vmem %s0, %s237
          %s239 = smul.u32 33, %s16
        $region44: #{tpu_custom_call.1} parent=39 // pred_fallthru
          _
      $region40: #{tpu_custom_call.1} parent=5 // pred_fallthru
        _
      %p240 = scmp.le.s32.totalorder 1, %s16
      %p241 = scmp.lt.s32.totalorder %s16, 3
      %p242 = pnand %p240, %p241
      %p243 = pneg %p242
      // Predicated region
      $region45: #{tpu_custom_call.1} parent=5 // pred_check
        _
      $region46: #{tpu_custom_call.1} parent=5 // pred_check_branch
        %245 = sbr.rel (%p242) target = $region48
      $region47: #{tpu_custom_call.1} parent=5 // pred_region
        %s246 = ssub.s32 %s16, 1
        %s247 = smul.u32 33, %s21
        %p248 = scmp.lt.s32.totalorder %s247, 65
        %s249 = scalar_select %p248, %s247, 65
        %s250 = smul.addr %s249, 8
        %s251 = scalar_lea.vmem %s0, %s250
        %p252 = pneg %p42
        %p253 = pneg %p39
        %p254 = pneg %p63
        %p255 = pneg %p60
        %p256 = pneg %p84
        %p257 = pneg %p81
        %p258 = pneg %p105
        %p259 = pneg %p102
        %p260 = pneg %p126
        %p261 = pneg %p123
        %p262 = pneg %p147
        %p263 = pneg %p144
        %p264 = pneg %p168
        %p265 = pneg %p165
        %p266 = pneg %p194
        %p267 = pneg %p191
        %s268 = sand.u32 %s181, 1
        %s269 = scalar_lea.sflag [#allocation3], %s268
        %s270 = sand.u32 %s181, 1
        %s271 = smul.addr %s270, 16
        %s272 = scalar_lea.vmem [#allocation2], %s271
        %s273 = smul.u32 33, %s21
        %p274 = scmp.lt.s32.totalorder %s273, 65
        %s275 = scalar_select %p274, %s273, 65
        %s276 = smul.addr %s275, 8
        %s277 = scalar_lea.vmem %s0, %s276
        %s278 = smul.u32 33, %s21
        %s279 = smul.u32 2, %s21
        %v280 = vld [vmem:[%s277] sm:$0xff]
        %v281 = vld [vmem:[%s277 + $0x8] sm:$0xff]
        %v282 = vld [vmem:[%s277 + $0x10] sm:$0xff]
        %v283 = vld [vmem:[%s277 + $0x18] sm:$0xff]
        %v284 = vld [vmem:[%s277 + $0x20] sm:$0xff]
        %v285 = vld [vmem:[%s277 + $0x28] sm:$0xff]
        %v286 = vld [vmem:[%s277 + $0x30] sm:$0xff]
        %v287 = vld [vmem:[%s277 + $0x38] sm:$0xff]
        %v288 = vld [vmem:[%s277 + $0x40] sm:$0xff]
        %v289 = vld [vmem:[%s277 + $0x48] sm:$0xff]
        %v290 = vld [vmem:[%s277 + $0x50] sm:$0xff]
        %v291 = vld [vmem:[%s277 + $0x58] sm:$0xff]
        %v292 = vld [vmem:[%s277 + $0x60] sm:$0xff]
        %v293 = vld [vmem:[%s277 + $0x68] sm:$0xff]
        %v294 = vld [vmem:[%s277 + $0x70] sm:$0xff]
        %v295 = vld [vmem:[%s277 + $0x78] sm:$0xff]
        %v296 = vld [vmem:[%s277 + $0x80] sm:$0xff]
        %v297 = vld [vmem:[%s277 + $0x88] sm:$0xff]
        %v298 = vld [vmem:[%s277 + $0x90] sm:$0xff]
        %v299 = vld [vmem:[%s277 + $0x98] sm:$0xff]
        %v300 = vld [vmem:[%s277 + $0xa0] sm:$0xff]
        %v301 = vld [vmem:[%s277 + $0xa8] sm:$0xff]
        %v302 = vld [vmem:[%s277 + $0xb0] sm:$0xff]
        %v303 = vld [vmem:[%s277 + $0xb8] sm:$0xff]
        %v304 = vld [vmem:[%s277 + $0xc0] sm:$0xff]
        %v305 = vld [vmem:[%s277 + $0xc8] sm:$0xff]
        %v306 = vld [vmem:[%s277 + $0xd0] sm:$0xff]
        %v307 = vld [vmem:[%s277 + $0xd8] sm:$0xff]
        %v308 = vld [vmem:[%s277 + $0xe0] sm:$0xff]
        %v309 = vld [vmem:[%s277 + $0xe8] sm:$0xff]
        %v310 = vld [vmem:[%s277 + $0xf0] sm:$0xff]
        %v311 = vld [vmem:[%s277 + $0xf8] sm:$0xff]
        %v312 = vld [vmem:[%s277 + $0x100] sm:$0xff]
        %v313 = vlaneseq
        %v314 = vand.u32 %v313, 127
        %315 = vset.pattern.permute.xlu0 0
        %316 = vperm.xlu0 %315, %v280
        %v317 = vpop.permute.xlu0 %316
        %318 = vset.pattern.permute.xlu0 0
        %319 = vperm.xlu0 %318, %v281
        %v320 = vpop.permute.xlu0 %319
        %321 = vset.pattern.permute.xlu0 0
        %322 = vperm.xlu0 %321, %v282
        %v323 = vpop.permute.xlu0 %322
        %324 = vset.pattern.permute.xlu0 0
        %325 = vperm.xlu0 %324, %v283
        %v326 = vpop.permute.xlu0 %325
        %327 = vset.pattern.permute.xlu0 0
        %328 = vperm.xlu0 %327, %v284
        %v329 = vpop.permute.xlu0 %328
        %330 = vset.pattern.permute.xlu0 0
        %331 = vperm.xlu0 %330, %v285
        %v332 = vpop.permute.xlu0 %331
        %333 = vset.pattern.permute.xlu0 0
        %334 = vperm.xlu0 %333, %v286
        %v335 = vpop.permute.xlu0 %334
        %336 = vset.pattern.permute.xlu0 0
        %337 = vperm.xlu0 %336, %v287
        %v338 = vpop.permute.xlu0 %337
        %339 = vset.pattern.permute.xlu0 0
        %340 = vperm.xlu0 %339, %v288
        %v341 = vpop.permute.xlu0 %340
        %342 = vset.pattern.permute.xlu0 0
        %343 = vperm.xlu0 %342, %v289
        %v344 = vpop.permute.xlu0 %343
        %345 = vset.pattern.permute.xlu0 0
        %346 = vperm.xlu0 %345, %v290
        %v347 = vpop.permute.xlu0 %346
        %348 = vset.pattern.permute.xlu0 0
        %349 = vperm.xlu0 %348, %v291
        %v350 = vpop.permute.xlu0 %349
        %351 = vset.pattern.permute.xlu0 0
        %352 = vperm.xlu0 %351, %v292
        %v353 = vpop.permute.xlu0 %352
        %354 = vset.pattern.permute.xlu0 0
        %355 = vperm.xlu0 %354, %v293
        %v356 = vpop.permute.xlu0 %355
        %357 = vset.pattern.permute.xlu0 0
        %358 = vperm.xlu0 %357, %v294
        %v359 = vpop.permute.xlu0 %358
        %360 = vset.pattern.permute.xlu0 0
        %361 = vperm.xlu0 %360, %v295
        %v362 = vpop.permute.xlu0 %361
        %363 = vset.pattern.permute.xlu0 0
        %364 = vperm.xlu0 %363, %v296
        %v365 = vpop.permute.xlu0 %364
        %366 = vset.pattern.permute.xlu0 0
        %367 = vperm.xlu0 %366, %v297
        %v368 = vpop.permute.xlu0 %367
        %369 = vset.pattern.permute.xlu0 0
        %370 = vperm.xlu0 %369, %v298
        %v371 = vpop.permute.xlu0 %370
        %372 = vset.pattern.permute.xlu0 0
        %373 = vperm.xlu0 %372, %v299
        %v374 = vpop.permute.xlu0 %373
        %375 = vset.pattern.permute.xlu0 0
        %376 = vperm.xlu0 %375, %v300
        %v377 = vpop.permute.xlu0 %376
        %378 = vset.pattern.permute.xlu0 0
        %379 = vperm.xlu0 %378, %v301
        %v380 = vpop.permute.xlu0 %379
        %381 = vset.pattern.permute.xlu0 0
        %382 = vperm.xlu0 %381, %v302
        %v383 = vpop.permute.xlu0 %382
        %384 = vset.pattern.permute.xlu0 0
        %385 = vperm.xlu0 %384, %v303
        %v386 = vpop.permute.xlu0 %385
        %387 = vset.pattern.permute.xlu0 0
        %388 = vperm.xlu0 %387, %v304
        %v389 = vpop.permute.xlu0 %388
        %390 = vset.pattern.permute.xlu0 0
        %391 = vperm.xlu0 %390, %v305
        %v392 = vpop.permute.xlu0 %391
        %393 = vset.pattern.permute.xlu0 0
        %394 = vperm.xlu0 %393, %v306
        %v395 = vpop.permute.xlu0 %394
        %396 = vset.pattern.permute.xlu0 0
        %397 = vperm.xlu0 %396, %v307
        %v398 = vpop.permute.xlu0 %397
        %399 = vset.pattern.permute.xlu0 0
        %400 = vperm.xlu0 %399, %v308
        %v401 = vpop.permute.xlu0 %400
        %402 = vset.pattern.permute.xlu0 0
        %403 = vperm.xlu0 %402, %v309
        %v404 = vpop.permute.xlu0 %403
        %405 = vset.pattern.permute.xlu0 0
        %406 = vperm.xlu0 %405, %v310
        %v407 = vpop.permute.xlu0 %406
        %408 = vset.pattern.permute.xlu0 0
        %409 = vperm.xlu0 %408, %v311
        %v410 = vpop.permute.xlu0 %409
        %411 = vset.pattern.permute.xlu0 0
        %412 = vperm.xlu0 %411, %v312
        %v413 = vpop.permute.xlu0 %412
        %vm414 = vcmp.eq.s32.totalorder %v314, %v317
        %vm415 = vcmp.eq.s32.totalorder %v314, %v320
        %vm416 = vcmp.eq.s32.totalorder %v314, %v323
        %vm417 = vcmp.eq.s32.totalorder %v314, %v326
        %vm418 = vcmp.eq.s32.totalorder %v314, %v329
        %vm419 = vcmp.eq.s32.totalorder %v314, %v332
        %vm420 = vcmp.eq.s32.totalorder %v314, %v335
        %vm421 = vcmp.eq.s32.totalorder %v314, %v338
        %vm422 = vcmp.eq.s32.totalorder %v314, %v341
        %vm423 = vcmp.eq.s32.totalorder %v314, %v344
        %vm424 = vcmp.eq.s32.totalorder %v314, %v347
        %vm425 = vcmp.eq.s32.totalorder %v314, %v350
        %vm426 = vcmp.eq.s32.totalorder %v314, %v353
        %vm427 = vcmp.eq.s32.totalorder %v314, %v356
        %vm428 = vcmp.eq.s32.totalorder %v314, %v359
        %vm429 = vcmp.eq.s32.totalorder %v314, %v362
        %vm430 = vcmp.eq.s32.totalorder %v314, %v365
        %vm431 = vcmp.eq.s32.totalorder %v314, %v368
        %vm432 = vcmp.eq.s32.totalorder %v314, %v371
        %vm433 = vcmp.eq.s32.totalorder %v314, %v374
        %vm434 = vcmp.eq.s32.totalorder %v314, %v377
        %vm435 = vcmp.eq.s32.totalorder %v314, %v380
        %vm436 = vcmp.eq.s32.totalorder %v314, %v383
        %vm437 = vcmp.eq.s32.totalorder %v314, %v386
        %vm438 = vcmp.eq.s32.totalorder %v314, %v389
        %vm439 = vcmp.eq.s32.totalorder %v314, %v392
        %vm440 = vcmp.eq.s32.totalorder %v314, %v395
        %vm441 = vcmp.eq.s32.totalorder %v314, %v398
        %vm442 = vcmp.eq.s32.totalorder %v314, %v401
        %vm443 = vcmp.eq.s32.totalorder %v314, %v404
        %vm444 = vcmp.eq.s32.totalorder %v314, %v407
        %vm445 = vcmp.eq.s32.totalorder %v314, %v410
        %vm446 = vcmp.eq.s32.totalorder %v314, %v413
        %v447 = vsel %vm414, 1, 0
        %v448 = vsel %vm415, 1, 0
        %v449 = vsel %vm416, 1, 0
        %v450 = vsel %vm417, 1, 0
        %v451 = vsel %vm418, 1, 0
        %v452 = vsel %vm419, 1, 0
        %v453 = vsel %vm420, 1, 0
        %v454 = vsel %vm421, 1, 0
        %v455 = vsel %vm422, 1, 0
        %v456 = vsel %vm423, 1, 0
        %v457 = vsel %vm424, 1, 0
        %v458 = vsel %vm425, 1, 0
        %v459 = vsel %vm426, 1, 0
        %v460 = vsel %vm427, 1, 0
        %v461 = vsel %vm428, 1, 0
        %v462 = vsel %vm429, 1, 0
        %v463 = vsel %vm430, 1, 0
        %v464 = vsel %vm431, 1, 0
        %v465 = vsel %vm432, 1, 0
        %v466 = vsel %vm433, 1, 0
        %v467 = vsel %vm434, 1, 0
        %v468 = vsel %vm435, 1, 0
        %v469 = vsel %vm436, 1, 0
        %v470 = vsel %vm437, 1, 0
        %v471 = vsel %vm438, 1, 0
        %v472 = vsel %vm439, 1, 0
        %v473 = vsel %vm440, 1, 0
        %v474 = vsel %vm441, 1, 0
        %v475 = vsel %vm442, 1, 0
        %v476 = vsel %vm443, 1, 0
        %v477 = vsel %vm444, 1, 0
        %v478 = vsel %vm445, 1, 0
        %v479 = vsel %vm446, 1, 0
        %v480 = vcvt.s32.f32 %v447
        %v481 = vcvt.s32.f32 %v448
        %v482 = vcvt.s32.f32 %v449
        %v483 = vcvt.s32.f32 %v450
        %v484 = vcvt.s32.f32 %v451
        %v485 = vcvt.s32.f32 %v452
        %v486 = vcvt.s32.f32 %v453
        %v487 = vcvt.s32.f32 %v454
        %v488 = vcvt.s32.f32 %v455
        %v489 = vcvt.s32.f32 %v456
        %v490 = vcvt.s32.f32 %v457
        %v491 = vcvt.s32.f32 %v458
        %v492 = vcvt.s32.f32 %v459
        %v493 = vcvt.s32.f32 %v460
        %v494 = vcvt.s32.f32 %v461
        %v495 = vcvt.s32.f32 %v462
        %v496 = vcvt.s32.f32 %v463
        %v497 = vcvt.s32.f32 %v464
        %v498 = vcvt.s32.f32 %v465
        %v499 = vcvt.s32.f32 %v466
        %v500 = vcvt.s32.f32 %v467
        %v501 = vcvt.s32.f32 %v468
        %v502 = vcvt.s32.f32 %v469
        %v503 = vcvt.s32.f32 %v470
        %v504 = vcvt.s32.f32 %v471
        %v505 = vcvt.s32.f32 %v472
        %v506 = vcvt.s32.f32 %v473
        %v507 = vcvt.s32.f32 %v474
        %v508 = vcvt.s32.f32 %v475
        %v509 = vcvt.s32.f32 %v476
        %v510 = vcvt.s32.f32 %v477
        %v511 = vcvt.s32.f32 %v478
        %v512 = vcvt.s32.f32 %v479
        %v513 = vld [vmem:[%s1] sm:$0xff]
        %v514 = vld [vmem:[%s1 + $0x8] sm:$0xff]
        %v515 = vld [vmem:[%s1 + $0x10] sm:$0xff]
        %v516 = vld [vmem:[%s1 + $0x18] sm:$0xff]
        %v517 = vld [vmem:[%s1 + $0x20] sm:$0xff]
        %v518 = vld [vmem:[%s1 + $0x28] sm:$0xff]
        %v519 = vld [vmem:[%s1 + $0x30] sm:$0xff]
        %v520 = vld [vmem:[%s1 + $0x38] sm:$0xff]
        %v521 = vld [vmem:[%s1 + $0x40] sm:$0xff]
        %v522 = vld [vmem:[%s1 + $0x48] sm:$0xff]
        %v523 = vld [vmem:[%s1 + $0x50] sm:$0xff]
        %v524 = vld [vmem:[%s1 + $0x58] sm:$0xff]
        %v525 = vld [vmem:[%s1 + $0x60] sm:$0xff]
        %v526 = vld [vmem:[%s1 + $0x68] sm:$0xff]
        %v527 = vld [vmem:[%s1 + $0x70] sm:$0xff]
        %v528 = vld [vmem:[%s1 + $0x78] sm:$0xff]
        %529 = vmatprep.subr.mxu0 0.0
        %530 = vmatpush1.msra.mxu0 %v528
        %531 = vmatprep.subr.mxu0 0.0
        %532 = vmatpush1.msra.mxu0 %v527
        %533 = vmatprep.subr.mxu0 0.0
        %534 = vmatpush1.msra.mxu0 %v526
        %535 = vmatprep.subr.mxu0 0.0
        %536 = vmatpush1.msra.mxu0 %v525
        %537 = vmatprep.subr.mxu0 0.0
        %538 = vmatpush1.msra.mxu0 %v524
        %539 = vmatprep.subr.mxu0 0.0
        %540 = vmatpush1.msra.mxu0 %v523
        %541 = vmatprep.subr.mxu0 0.0
        %542 = vmatpush1.msra.mxu0 %v522
        %543 = vmatprep.subr.mxu0 0.0
        %544 = vmatpush1.msra.mxu0 %v521
        %545 = vmatprep.subr.mxu0 0.0
        %546 = vmatpush1.msra.mxu0 %v520
        %547 = vmatprep.subr.mxu0 0.0
        %548 = vmatpush1.msra.mxu0 %v519
        %549 = vmatprep.subr.mxu0 0.0
        %550 = vmatpush1.msra.mxu0 %v518
        %551 = vmatprep.subr.mxu0 0.0
        %552 = vmatpush1.msra.mxu0 %v517
        %553 = vmatprep.subr.mxu0 0.0
        %554 = vmatpush1.msra.mxu0 %v516
        %555 = vmatprep.subr.mxu0 0.0
        %556 = vmatpush1.msra.mxu0 %v515
        %557 = vmatprep.subr.mxu0 0.0
        %558 = vmatpush1.msra.mxu0 %v514
        %559 = vmatprep.subr.mxu0 0.0
        %560 = vmatpush1.msra.mxu0 %v513
        %561 = vmatprep.subr.mxu0 0.0
        %562 = vmatpush2.msra.mxu0 0.0
        %563 = vmatprep.subr.mxu0 0.0
        %564 = vmatpush2.msra.mxu0 0.0
        %565 = vmatprep.subr.mxu0 0.0
        %566 = vmatpush2.msra.mxu0 0.0
        %567 = vmatprep.subr.mxu0 0.0
        %568 = vmatpush2.msra.mxu0 0.0
        %569 = vmatprep.subr.mxu0 0.0
        %570 = vmatpush2.msra.mxu0 0.0
        %571 = vmatprep.subr.mxu0 0.0
        %572 = vmatpush2.msra.mxu0 0.0
        %573 = vmatprep.subr.mxu0 0.0
        %574 = vmatpush2.msra.mxu0 0.0
        %575 = vmatprep.subr.mxu0 0.0
        %576 = vmatpush2.msra.mxu0 0.0
        %577 = vmatprep.subr.mxu0 0.0
        %578 = vmatpush2.msra.mxu0 0.0
        %579 = vmatprep.subr.mxu0 0.0
        %580 = vmatpush2.msra.mxu0 0.0
        %581 = vmatprep.subr.mxu0 0.0
        %582 = vmatpush2.msra.mxu0 0.0
        %583 = vmatprep.subr.mxu0 0.0
        %584 = vmatpush2.msra.mxu0 0.0
        %585 = vmatprep.subr.mxu0 0.0
        %586 = vmatpush2.msra.mxu0 0.0
        %587 = vmatprep.subr.mxu0 0.0
        %588 = vmatpush2.msra.mxu0 0.0
        %589 = vmatprep.subr.mxu0 0.0
        %590 = vmatpush2.msra.mxu0 0.0
        %591 = vmatprep.subr.mxu0 0.0
        %592 = vmatpush2.msra.mxu0 0.0
        %593 = vmatprep.mubr.f32.mxu0 0.0
        %594 = vmatmul.mubr.f32.gmra.mxu0 %v480
        %v595 = vpop.f32.mrf.mxu0
        %v596 = vadd.f32 0.0, %v595
        %v597 = vpop.f32.mrf.mxu0
        %598 = vmatprep.mubr.f32.mxu0 0.0
        %599 = vmatmul.mubr.f32.gmra.mxu0 %v481
        %v600 = vpop.f32.mrf.mxu0
        %v601 = vadd.f32 0.0, %v600
        %v602 = vpop.f32.mrf.mxu0
        %603 = vmatprep.mubr.f32.mxu0 0.0
        %604 = vmatmul.mubr.f32.gmra.mxu0 %v482
        %v605 = vpop.f32.mrf.mxu0
        %v606 = vadd.f32 0.0, %v605
        %v607 = vpop.f32.mrf.mxu0
        %608 = vmatprep.mubr.f32.mxu0 0.0
        %609 = vmatmul.mubr.f32.gmra.mxu0 %v483
        %v610 = vpop.f32.mrf.mxu0
        %v611 = vadd.f32 0.0, %v610
        %v612 = vpop.f32.mrf.mxu0
        %613 = vmatprep.mubr.f32.mxu0 0.0
        %614 = vmatmul.mubr.f32.gmra.mxu0 %v484
        %v615 = vpop.f32.mrf.mxu0
        %v616 = vadd.f32 0.0, %v615
        %v617 = vpop.f32.mrf.mxu0
        %618 = vmatprep.mubr.f32.mxu0 0.0
        %619 = vmatmul.mubr.f32.gmra.mxu0 %v485
        %v620 = vpop.f32.mrf.mxu0
        %v621 = vadd.f32 0.0, %v620
        %v622 = vpop.f32.mrf.mxu0
        %623 = vmatprep.mubr.f32.mxu0 0.0
        %624 = vmatmul.mubr.f32.gmra.mxu0 %v486
        %v625 = vpop.f32.mrf.mxu0
        %v626 = vadd.f32 0.0, %v625
        %v627 = vpop.f32.mrf.mxu0
        %628 = vmatprep.mubr.f32.mxu0 0.0
        %629 = vmatmul.mubr.f32.gmra.mxu0 %v487
        %v630 = vpop.f32.mrf.mxu0
        %v631 = vadd.f32 0.0, %v630
        %v632 = vpop.f32.mrf.mxu0
        %633 = vmatprep.mubr.f32.mxu0 0.0
        %634 = vmatmul.mubr.f32.gmra.mxu0 %v488
        %v635 = vpop.f32.mrf.mxu0
        %v636 = vadd.f32 0.0, %v635
        %v637 = vpop.f32.mrf.mxu0
        %638 = vmatprep.mubr.f32.mxu0 0.0
        %639 = vmatmul.mubr.f32.gmra.mxu0 %v489
        %v640 = vpop.f32.mrf.mxu0
        %v641 = vadd.f32 0.0, %v640
        %v642 = vpop.f32.mrf.mxu0
        %643 = vmatprep.mubr.f32.mxu0 0.0
        %644 = vmatmul.mubr.f32.gmra.mxu0 %v490
        %v645 = vpop.f32.mrf.mxu0
        %v646 = vadd.f32 0.0, %v645
        %v647 = vpop.f32.mrf.mxu0
        %648 = vmatprep.mubr.f32.mxu0 0.0
        %649 = vmatmul.mubr.f32.gmra.mxu0 %v491
        %v650 = vpop.f32.mrf.mxu0
        %v651 = vadd.f32 0.0, %v650
        %v652 = vpop.f32.mrf.mxu0
        %653 = vmatprep.mubr.f32.mxu0 0.0
        %654 = vmatmul.mubr.f32.gmra.mxu0 %v492
        %v655 = vpop.f32.mrf.mxu0
        %v656 = vadd.f32 0.0, %v655
        %v657 = vpop.f32.mrf.mxu0
        %658 = vmatprep.mubr.f32.mxu0 0.0
        %659 = vmatmul.mubr.f32.gmra.mxu0 %v493
        %v660 = vpop.f32.mrf.mxu0
        %v661 = vadd.f32 0.0, %v660
        %v662 = vpop.f32.mrf.mxu0
        %663 = vmatprep.mubr.f32.mxu0 0.0
        %664 = vmatmul.mubr.f32.gmra.mxu0 %v494
        %v665 = vpop.f32.mrf.mxu0
        %v666 = vadd.f32 0.0, %v665
        %v667 = vpop.f32.mrf.mxu0
        %668 = vmatprep.mubr.f32.mxu0 0.0
        %669 = vmatmul.mubr.f32.gmra.mxu0 %v495
        %v670 = vpop.f32.mrf.mxu0
        %v671 = vadd.f32 0.0, %v670
        %v672 = vpop.f32.mrf.mxu0
        %673 = vmatprep.mubr.f32.mxu0 0.0
        %674 = vmatmul.mubr.f32.gmra.mxu0 %v496
        %v675 = vpop.f32.mrf.mxu0
        %v676 = vadd.f32 0.0, %v675
        %v677 = vpop.f32.mrf.mxu0
        %678 = vmatprep.mubr.f32.mxu0 0.0
        %679 = vmatmul.mubr.f32.gmra.mxu0 %v497
        %v680 = vpop.f32.mrf.mxu0
        %v681 = vadd.f32 0.0, %v680
        %v682 = vpop.f32.mrf.mxu0
        %683 = vmatprep.mubr.f32.mxu0 0.0
        %684 = vmatmul.mubr.f32.gmra.mxu0 %v498
        %v685 = vpop.f32.mrf.mxu0
        %v686 = vadd.f32 0.0, %v685
        %v687 = vpop.f32.mrf.mxu0
        %688 = vmatprep.mubr.f32.mxu0 0.0
        %689 = vmatmul.mubr.f32.gmra.mxu0 %v499
        %v690 = vpop.f32.mrf.mxu0
        %v691 = vadd.f32 0.0, %v690
        %v692 = vpop.f32.mrf.mxu0
        %693 = vmatprep.mubr.f32.mxu0 0.0
        %694 = vmatmul.mubr.f32.gmra.mxu0 %v500
        %v695 = vpop.f32.mrf.mxu0
        %v696 = vadd.f32 0.0, %v695
        %v697 = vpop.f32.mrf.mxu0
        %698 = vmatprep.mubr.f32.mxu0 0.0
        %699 = vmatmul.mubr.f32.gmra.mxu0 %v501
        %v700 = vpop.f32.mrf.mxu0
        %v701 = vadd.f32 0.0, %v700
        %v702 = vpop.f32.mrf.mxu0
        %703 = vmatprep.mubr.f32.mxu0 0.0
        %704 = vmatmul.mubr.f32.gmra.mxu0 %v502
        %v705 = vpop.f32.mrf.mxu0
        %v706 = vadd.f32 0.0, %v705
        %v707 = vpop.f32.mrf.mxu0
        %708 = vmatprep.mubr.f32.mxu0 0.0
        %709 = vmatmul.mubr.f32.gmra.mxu0 %v503
        %v710 = vpop.f32.mrf.mxu0
        %v711 = vadd.f32 0.0, %v710
        %v712 = vpop.f32.mrf.mxu0
        %713 = vmatprep.mubr.f32.mxu0 0.0
        %714 = vmatmul.mubr.f32.gmra.mxu0 %v504
        %v715 = vpop.f32.mrf.mxu0
        %v716 = vadd.f32 0.0, %v715
        %v717 = vpop.f32.mrf.mxu0
        %718 = vmatprep.mubr.f32.mxu0 0.0
        %719 = vmatmul.mubr.f32.gmra.mxu0 %v505
        %v720 = vpop.f32.mrf.mxu0
        %v721 = vadd.f32 0.0, %v720
        %v722 = vpop.f32.mrf.mxu0
        %723 = vmatprep.mubr.f32.mxu0 0.0
        %724 = vmatmul.mubr.f32.gmra.mxu0 %v506
        %v725 = vpop.f32.mrf.mxu0
        %v726 = vadd.f32 0.0, %v725
        %v727 = vpop.f32.mrf.mxu0
        %728 = vmatprep.mubr.f32.mxu0 0.0
        %729 = vmatmul.mubr.f32.gmra.mxu0 %v507
        %v730 = vpop.f32.mrf.mxu0
        %v731 = vadd.f32 0.0, %v730
        %v732 = vpop.f32.mrf.mxu0
        %733 = vmatprep.mubr.f32.mxu0 0.0
        %734 = vmatmul.mubr.f32.gmra.mxu0 %v508
        %v735 = vpop.f32.mrf.mxu0
        %v736 = vadd.f32 0.0, %v735
        %v737 = vpop.f32.mrf.mxu0
        %738 = vmatprep.mubr.f32.mxu0 0.0
        %739 = vmatmul.mubr.f32.gmra.mxu0 %v509
        %v740 = vpop.f32.mrf.mxu0
        %v741 = vadd.f32 0.0, %v740
        %v742 = vpop.f32.mrf.mxu0
        %743 = vmatprep.mubr.f32.mxu0 0.0
        %744 = vmatmul.mubr.f32.gmra.mxu0 %v510
        %v745 = vpop.f32.mrf.mxu0
        %v746 = vadd.f32 0.0, %v745
        %v747 = vpop.f32.mrf.mxu0
        %748 = vmatprep.mubr.f32.mxu0 0.0
        %749 = vmatmul.mubr.f32.gmra.mxu0 %v511
        %v750 = vpop.f32.mrf.mxu0
        %v751 = vadd.f32 0.0, %v750
        %v752 = vpop.f32.mrf.mxu0
        %753 = vmatprep.mubr.f32.mxu0 0.0
        %754 = vmatmul.mubr.f32.gmra.mxu0 %v512
        %v755 = vpop.f32.mrf.mxu0
        %v756 = vadd.f32 0.0, %v755
        %v757 = vpop.f32.mrf.mxu0
        %758 = vdwg.mxu0
        %v759 = vld [vmem:[%s2] sm:$0xff]
        %v760 = vld [vmem:[%s2 + $0x8] sm:$0xff]
        %v761 = vld [vmem:[%s2 + $0x10] sm:$0xff]
        %v762 = vld [vmem:[%s2 + $0x18] sm:$0xff]
        %v763 = vld [vmem:[%s2 + $0x20] sm:$0xff]
        %v764 = vld [vmem:[%s2 + $0x28] sm:$0xff]
        %v765 = vld [vmem:[%s2 + $0x30] sm:$0xff]
        %v766 = vld [vmem:[%s2 + $0x38] sm:$0xff]
        %v767 = vld [vmem:[%s2 + $0x40] sm:$0xff]
        %v768 = vld [vmem:[%s2 + $0x48] sm:$0xff]
        %v769 = vld [vmem:[%s2 + $0x50] sm:$0xff]
        %v770 = vld [vmem:[%s2 + $0x58] sm:$0xff]
        %v771 = vld [vmem:[%s2 + $0x60] sm:$0xff]
        %v772 = vld [vmem:[%s2 + $0x68] sm:$0xff]
        %v773 = vld [vmem:[%s2 + $0x70] sm:$0xff]
        %v774 = vld [vmem:[%s2 + $0x78] sm:$0xff]
        %v775 = vld [vmem:[%s2 + $0x80] sm:$0xff]
        %v776 = vld [vmem:[%s2 + $0x88] sm:$0xff]
        %v777 = vld [vmem:[%s2 + $0x90] sm:$0xff]
        %v778 = vld [vmem:[%s2 + $0x98] sm:$0xff]
        %vm812 = vcmask 1046528
        %v813 = vrot.slane %v596, 1
        %v814 = vrot.slane %v601, 1
        %v815 = vsel %vm812, %v813, %v814
        %v816 = vrot.slane %v606, 1
        %v817 = vsel %vm812, %v814, %v816
        %v818 = vrot.slane %v611, 1
        %v819 = vsel %vm812, %v816, %v818
        %v820 = vrot.slane %v616, 1
        %v821 = vsel %vm812, %v818, %v820
        %v822 = vrot.slane %v621, 1
        %v823 = vsel %vm812, %v820, %v822
        %v824 = vrot.slane %v626, 1
        %v825 = vsel %vm812, %v822, %v824
        %v826 = vrot.slane %v631, 1
        %v827 = vsel %vm812, %v824, %v826
        %v828 = vrot.slane %v636, 1
        %v829 = vsel %vm812, %v826, %v828
        %v830 = vrot.slane %v641, 1
        %v831 = vsel %vm812, %v828, %v830
        %v832 = vrot.slane %v646, 1
        %v833 = vsel %vm812, %v830, %v832
        %v834 = vrot.slane %v651, 1
        %v835 = vsel %vm812, %v832, %v834
        %v836 = vrot.slane %v656, 1
        %v837 = vsel %vm812, %v834, %v836
        %v838 = vrot.slane %v661, 1
        %v839 = vsel %vm812, %v836, %v838
        %v840 = vrot.slane %v666, 1
        %v841 = vsel %vm812, %v838, %v840
        %v842 = vrot.slane %v671, 1
        %v843 = vsel %vm812, %v840, %v842
        %v844 = vrot.slane %v676, 1
        %v845 = vsel %vm812, %v842, %v844
        %v846 = vrot.slane %v681, 1
        %v847 = vsel %vm812, %v844, %v846
        %v848 = vrot.slane %v686, 1
        %v849 = vsel %vm812, %v846, %v848
        %v850 = vrot.slane %v691, 1
        %v851 = vsel %vm812, %v848, %v850
        %v852 = vrot.slane %v696, 1
        %v853 = vsel %vm812, %v850, %v852
        %v854 = vrot.slane %v701, 1
        %v855 = vsel %vm812, %v852, %v854
        %v856 = vrot.slane %v706, 1
        %v857 = vsel %vm812, %v854, %v856
        %v858 = vrot.slane %v711, 1
        %v859 = vsel %vm812, %v856, %v858
        %v860 = vrot.slane %v716, 1
        %v861 = vsel %vm812, %v858, %v860
        %v862 = vrot.slane %v721, 1
        %v863 = vsel %vm812, %v860, %v862
        %v864 = vrot.slane %v726, 1
        %v865 = vsel %vm812, %v862, %v864
        %v866 = vrot.slane %v731, 1
        %v867 = vsel %vm812, %v864, %v866
        %v868 = vrot.slane %v736, 1
        %v869 = vsel %vm812, %v866, %v868
        %v870 = vrot.slane %v741, 1
        %v871 = vsel %vm812, %v868, %v870
        %v872 = vrot.slane %v746, 1
        %v873 = vsel %vm812, %v870, %v872
        %v874 = vrot.slane %v751, 1
        %v875 = vsel %vm812, %v872, %v874
        %v876 = vrot.slane %v756, 1
        %v877 = vsel %vm812, %v874, %v876
        %vm878 = vcmask 261120
        %v879 = vsel %vm878, %v815, 0
        %v881 = vsel %vm878, %v817, 0
        %v883 = vsel %vm878, %v819, 0
        %v885 = vsel %vm878, %v821, 0
        %v887 = vsel %vm878, %v823, 0
        %v889 = vsel %vm878, %v825, 0
        %v891 = vsel %vm878, %v827, 0
        %v893 = vsel %vm878, %v829, 0
        %v895 = vsel %vm878, %v831, 0
        %v897 = vsel %vm878, %v833, 0
        %v899 = vsel %vm878, %v835, 0
        %v901 = vsel %vm878, %v837, 0
        %v903 = vsel %vm878, %v839, 0
        %v905 = vsel %vm878, %v841, 0
        %v907 = vsel %vm878, %v843, 0
        %v909 = vsel %vm878, %v845, 0
        %v911 = vsel %vm878, %v847, 0
        %v913 = vsel %vm878, %v849, 0
        %v915 = vsel %vm878, %v851, 0
        %v917 = vsel %vm878, %v853, 0
        %v919 = vsel %vm878, %v855, 0
        %v921 = vsel %vm878, %v857, 0
        %v923 = vsel %vm878, %v859, 0
        %v925 = vsel %vm878, %v861, 0
        %v927 = vsel %vm878, %v863, 0
        %v929 = vsel %vm878, %v865, 0
        %v931 = vsel %vm878, %v867, 0
        %v933 = vsel %vm878, %v869, 0
        %v935 = vsel %vm878, %v871, 0
        %v937 = vsel %vm878, %v873, 0
        %v939 = vsel %vm878, %v875, 0
        %v941 = vsel %vm878, %v877, 0
        %943 = vmatprep.subr.mxu0 0.0
        %944 = vmatpush1.msra.mxu0 0.0
        %945 = vmatprep.subr.mxu0 0.0
        %946 = vmatpush1.msra.mxu0 0.0
        %947 = vmatprep.subr.mxu0 0.0
        %948 = vmatpush1.msra.mxu0 0.0
        %949 = vmatprep.subr.mxu0 0.0
        %950 = vmatpush1.msra.mxu0 0.0
        %951 = vmatprep.subr.mxu0 0.0
        %952 = vmatpush1.msra.mxu0 0.0
        %953 = vmatprep.subr.mxu0 0.0
        %954 = vmatpush1.msra.mxu0 0.0
        %955 = vmatprep.subr.mxu0 0.0
        %956 = vmatpush1.msra.mxu0 0.0
        %957 = vmatprep.subr.mxu0 0.0
        %958 = vmatpush1.msra.mxu0 0.0
        %959 = vmatprep.subr.mxu0 0.0
        %960 = vmatpush1.msra.mxu0 0.0
        %961 = vmatprep.subr.mxu0 0.0
        %962 = vmatpush1.msra.mxu0 0.0
        %963 = vmatprep.subr.mxu0 0.0
        %964 = vmatpush1.msra.mxu0 0.0
        %965 = vmatprep.subr.mxu0 0.0
        %966 = vmatpush1.msra.mxu0 0.0
        %967 = vmatprep.subr.mxu0 0.0
        %968 = vmatpush1.msra.mxu0 %v766
        %969 = vmatprep.subr.mxu0 0.0
        %970 = vmatpush1.msra.mxu0 %v765
        %971 = vmatprep.subr.mxu0 0.0
        %972 = vmatpush1.msra.mxu0 %v764
        %973 = vmatprep.subr.mxu0 0.0
        %974 = vmatpush1.msra.mxu0 %v763
        %975 = vmatprep.subr.mxu0 0.0
        %976 = vmatpush2.msra.mxu0 0.0
        %977 = vmatprep.subr.mxu0 0.0
        %978 = vmatpush2.msra.mxu0 0.0
        %979 = vmatprep.subr.mxu0 0.0
        %980 = vmatpush2.msra.mxu0 0.0
        %981 = vmatprep.subr.mxu0 0.0
        %982 = vmatpush2.msra.mxu0 0.0
        %983 = vmatprep.subr.mxu0 0.0
        %984 = vmatpush2.msra.mxu0 0.0
        %985 = vmatprep.subr.mxu0 0.0
        %986 = vmatpush2.msra.mxu0 0.0
        %987 = vmatprep.subr.mxu0 0.0
        %988 = vmatpush2.msra.mxu0 0.0
        %989 = vmatprep.subr.mxu0 0.0
        %990 = vmatpush2.msra.mxu0 0.0
        %991 = vmatprep.subr.mxu0 0.0
        %992 = vmatpush2.msra.mxu0 0.0
        %993 = vmatprep.subr.mxu0 0.0
        %994 = vmatpush2.msra.mxu0 0.0
        %995 = vmatprep.subr.mxu0 0.0
        %996 = vmatpush2.msra.mxu0 0.0
        %997 = vmatprep.subr.mxu0 0.0
        %998 = vmatpush2.msra.mxu0 0.0
        %999 = vmatprep.subr.mxu0 0.0
        %1000 = vmatpush2.msra.mxu0 0.0
        %1001 = vmatprep.subr.mxu0 0.0
        %1002 = vmatpush2.msra.mxu0 0.0
        %1003 = vmatprep.subr.mxu0 0.0
        %1004 = vmatpush2.msra.mxu0 0.0
        %1005 = vmatprep.subr.mxu0 0.0
        %1006 = vmatpush2.msra.mxu0 0.0
        %1007 = vmatprep.mubr.f32.mxu0 0.0
        %1008 = vmatmul.mubr.f32.gmra.mxu0 %v879
        %v1009 = vpop.f32.mrf.mxu0
        %v1010 = vadd.f32 0.0, %v1009
        %v1011 = vpop.f32.mrf.mxu0
        %1012 = vmatprep.mubr.f32.mxu0 0.0
        %1013 = vmatmul.mubr.f32.gmra.mxu0 %v881
        %v1014 = vpop.f32.mrf.mxu0
        %v1015 = vadd.f32 0.0, %v1014
        %v1016 = vpop.f32.mrf.mxu0
        %1017 = vmatprep.mubr.f32.mxu0 0.0
        %1018 = vmatmul.mubr.f32.gmra.mxu0 %v883
        %v1019 = vpop.f32.mrf.mxu0
        %v1020 = vadd.f32 0.0, %v1019
        %v1021 = vpop.f32.mrf.mxu0
        %1022 = vmatprep.mubr.f32.mxu0 0.0
        %1023 = vmatmul.mubr.f32.gmra.mxu0 %v885
        %v1024 = vpop.f32.mrf.mxu0
        %v1025 = vadd.f32 0.0, %v1024
        %v1026 = vpop.f32.mrf.mxu0
        %1027 = vmatprep.mubr.f32.mxu0 0.0
        %1028 = vmatmul.mubr.f32.gmra.mxu0 %v887
        %v1029 = vpop.f32.mrf.mxu0
        %v1030 = vadd.f32 0.0, %v1029
        %v1031 = vpop.f32.mrf.mxu0
        %1032 = vmatprep.mubr.f32.mxu0 0.0
        %1033 = vmatmul.mubr.f32.gmra.mxu0 %v889
        %v1034 = vpop.f32.mrf.mxu0
        %v1035 = vadd.f32 0.0, %v1034
        %v1036 = vpop.f32.mrf.mxu0
        %1037 = vmatprep.mubr.f32.mxu0 0.0
        %1038 = vmatmul.mubr.f32.gmra.mxu0 %v891
        %v1039 = vpop.f32.mrf.mxu0
        %v1040 = vadd.f32 0.0, %v1039
        %v1041 = vpop.f32.mrf.mxu0
        %1042 = vmatprep.mubr.f32.mxu0 0.0
        %1043 = vmatmul.mubr.f32.gmra.mxu0 %v893
        %v1044 = vpop.f32.mrf.mxu0
        %v1045 = vadd.f32 0.0, %v1044
        %v1046 = vpop.f32.mrf.mxu0
        %1047 = vmatprep.mubr.f32.mxu0 0.0
        %1048 = vmatmul.mubr.f32.gmra.mxu0 %v895
        %v1049 = vpop.f32.mrf.mxu0
        %v1050 = vadd.f32 0.0, %v1049
        %v1051 = vpop.f32.mrf.mxu0
        %1052 = vmatprep.mubr.f32.mxu0 0.0
        %1053 = vmatmul.mubr.f32.gmra.mxu0 %v897
        %v1054 = vpop.f32.mrf.mxu0
        %v1055 = vadd.f32 0.0, %v1054
        %v1056 = vpop.f32.mrf.mxu0
        %1057 = vmatprep.mubr.f32.mxu0 0.0
        %1058 = vmatmul.mubr.f32.gmra.mxu0 %v899
        %v1059 = vpop.f32.mrf.mxu0
        %v1060 = vadd.f32 0.0, %v1059
        %v1061 = vpop.f32.mrf.mxu0
        %1062 = vmatprep.mubr.f32.mxu0 0.0
        %1063 = vmatmul.mubr.f32.gmra.mxu0 %v901
        %v1064 = vpop.f32.mrf.mxu0
        %v1065 = vadd.f32 0.0, %v1064
        %v1066 = vpop.f32.mrf.mxu0
        %1067 = vmatprep.mubr.f32.mxu0 0.0
        %1068 = vmatmul.mubr.f32.gmra.mxu0 %v903
        %v1069 = vpop.f32.mrf.mxu0
        %v1070 = vadd.f32 0.0, %v1069
        %v1071 = vpop.f32.mrf.mxu0
        %1072 = vmatprep.mubr.f32.mxu0 0.0
        %1073 = vmatmul.mubr.f32.gmra.mxu0 %v905
        %v1074 = vpop.f32.mrf.mxu0
        %v1075 = vadd.f32 0.0, %v1074
        %v1076 = vpop.f32.mrf.mxu0
        %1077 = vmatprep.mubr.f32.mxu0 0.0
        %1078 = vmatmul.mubr.f32.gmra.mxu0 %v907
        %v1079 = vpop.f32.mrf.mxu0
        %v1080 = vadd.f32 0.0, %v1079
        %v1081 = vpop.f32.mrf.mxu0
        %1082 = vmatprep.mubr.f32.mxu0 0.0
        %1083 = vmatmul.mubr.f32.gmra.mxu0 %v909
        %v1084 = vpop.f32.mrf.mxu0
        %v1085 = vadd.f32 0.0, %v1084
        %v1086 = vpop.f32.mrf.mxu0
        %1087 = vmatprep.mubr.f32.mxu0 0.0
        %1088 = vmatmul.mubr.f32.gmra.mxu0 %v911
        %v1089 = vpop.f32.mrf.mxu0
        %v1090 = vadd.f32 0.0, %v1089
        %v1091 = vpop.f32.mrf.mxu0
        %1092 = vmatprep.mubr.f32.mxu0 0.0
        %1093 = vmatmul.mubr.f32.gmra.mxu0 %v913
        %v1094 = vpop.f32.mrf.mxu0
        %v1095 = vadd.f32 0.0, %v1094
        %v1096 = vpop.f32.mrf.mxu0
        %1097 = vmatprep.mubr.f32.mxu0 0.0
        %1098 = vmatmul.mubr.f32.gmra.mxu0 %v915
        %v1099 = vpop.f32.mrf.mxu0
        %v1100 = vadd.f32 0.0, %v1099
        %v1101 = vpop.f32.mrf.mxu0
        %1102 = vmatprep.mubr.f32.mxu0 0.0
        %1103 = vmatmul.mubr.f32.gmra.mxu0 %v917
        %v1104 = vpop.f32.mrf.mxu0
        %v1105 = vadd.f32 0.0, %v1104
        %v1106 = vpop.f32.mrf.mxu0
        %1107 = vmatprep.mubr.f32.mxu0 0.0
        %1108 = vmatmul.mubr.f32.gmra.mxu0 %v919
        %v1109 = vpop.f32.mrf.mxu0
        %v1110 = vadd.f32 0.0, %v1109
        %v1111 = vpop.f32.mrf.mxu0
        %1112 = vmatprep.mubr.f32.mxu0 0.0
        %1113 = vmatmul.mubr.f32.gmra.mxu0 %v921
        %v1114 = vpop.f32.mrf.mxu0
        %v1115 = vadd.f32 0.0, %v1114
        %v1116 = vpop.f32.mrf.mxu0
        %1117 = vmatprep.mubr.f32.mxu0 0.0
        %1118 = vmatmul.mubr.f32.gmra.mxu0 %v923
        %v1119 = vpop.f32.mrf.mxu0
        %v1120 = vadd.f32 0.0, %v1119
        %v1121 = vpop.f32.mrf.mxu0
        %1122 = vmatprep.mubr.f32.mxu0 0.0
        %1123 = vmatmul.mubr.f32.gmra.mxu0 %v925
        %v1124 = vpop.f32.mrf.mxu0
        %v1125 = vadd.f32 0.0, %v1124
        %v1126 = vpop.f32.mrf.mxu0
        %1127 = vmatprep.mubr.f32.mxu0 0.0
        %1128 = vmatmul.mubr.f32.gmra.mxu0 %v927
        %v1129 = vpop.f32.mrf.mxu0
        %v1130 = vadd.f32 0.0, %v1129
        %v1131 = vpop.f32.mrf.mxu0
        %1132 = vmatprep.mubr.f32.mxu0 0.0
        %1133 = vmatmul.mubr.f32.gmra.mxu0 %v929
        %v1134 = vpop.f32.mrf.mxu0
        %v1135 = vadd.f32 0.0, %v1134
        %v1136 = vpop.f32.mrf.mxu0
        %1137 = vmatprep.mubr.f32.mxu0 0.0
        %1138 = vmatmul.mubr.f32.gmra.mxu0 %v931
        %v1139 = vpop.f32.mrf.mxu0
        %v1140 = vadd.f32 0.0, %v1139
        %v1141 = vpop.f32.mrf.mxu0
        %1142 = vmatprep.mubr.f32.mxu0 0.0
        %1143 = vmatmul.mubr.f32.gmra.mxu0 %v933
        %v1144 = vpop.f32.mrf.mxu0
        %v1145 = vadd.f32 0.0, %v1144
        %v1146 = vpop.f32.mrf.mxu0
        %1147 = vmatprep.mubr.f32.mxu0 0.0
        %1148 = vmatmul.mubr.f32.gmra.mxu0 %v935
        %v1149 = vpop.f32.mrf.mxu0
        %v1150 = vadd.f32 0.0, %v1149
        %v1151 = vpop.f32.mrf.mxu0
        %1152 = vmatprep.mubr.f32.mxu0 0.0
        %1153 = vmatmul.mubr.f32.gmra.mxu0 %v937
        %v1154 = vpop.f32.mrf.mxu0
        %v1155 = vadd.f32 0.0, %v1154
        %v1156 = vpop.f32.mrf.mxu0
        %1157 = vmatprep.mubr.f32.mxu0 0.0
        %1158 = vmatmul.mubr.f32.gmra.mxu0 %v939
        %v1159 = vpop.f32.mrf.mxu0
        %v1160 = vadd.f32 0.0, %v1159
        %v1161 = vpop.f32.mrf.mxu0
        %1162 = vmatprep.mubr.f32.mxu0 0.0
        %1163 = vmatmul.mubr.f32.gmra.mxu0 %v941
        %v1164 = vpop.f32.mrf.mxu0
        %v1165 = vadd.f32 0.0, %v1164
        %v1166 = vpop.f32.mrf.mxu0
        %1167 = vdwg.mxu0
        %v1168 = vsel %vm878, %v596, 0
        %v1170 = vsel %vm878, %v601, 0
        %v1172 = vsel %vm878, %v606, 0
        %v1174 = vsel %vm878, %v611, 0
        %v1176 = vsel %vm878, %v616, 0
        %v1178 = vsel %vm878, %v621, 0
        %v1180 = vsel %vm878, %v626, 0
        %v1182 = vsel %vm878, %v631, 0
        %v1184 = vsel %vm878, %v636, 0
        %v1186 = vsel %vm878, %v641, 0
        %v1188 = vsel %vm878, %v646, 0
        %v1190 = vsel %vm878, %v651, 0
        %v1192 = vsel %vm878, %v656, 0
        %v1194 = vsel %vm878, %v661, 0
        %v1196 = vsel %vm878, %v666, 0
        %v1198 = vsel %vm878, %v671, 0
        %v1200 = vsel %vm878, %v676, 0
        %v1202 = vsel %vm878, %v681, 0
        %v1204 = vsel %vm878, %v686, 0
        %v1206 = vsel %vm878, %v691, 0
        %v1208 = vsel %vm878, %v696, 0
        %v1210 = vsel %vm878, %v701, 0
        %v1212 = vsel %vm878, %v706, 0
        %v1214 = vsel %vm878, %v711, 0
        %v1216 = vsel %vm878, %v716, 0
        %v1218 = vsel %vm878, %v721, 0
        %v1220 = vsel %vm878, %v726, 0
        %v1222 = vsel %vm878, %v731, 0
        %v1224 = vsel %vm878, %v736, 0
        %v1226 = vsel %vm878, %v741, 0
        %v1228 = vsel %vm878, %v746, 0
        %v1230 = vsel %vm878, %v751, 0
        %1232 = vmatprep.subr.mxu0 0.0
        %1233 = vmatpush1.msra.mxu0 0.0
        %1234 = vmatprep.subr.mxu0 0.0
        %1235 = vmatpush1.msra.mxu0 0.0
        %1236 = vmatprep.subr.mxu0 0.0
        %1237 = vmatpush1.msra.mxu0 0.0
        %1238 = vmatprep.subr.mxu0 0.0
        %1239 = vmatpush1.msra.mxu0 0.0
        %1240 = vmatprep.subr.mxu0 0.0
        %1241 = vmatpush1.msra.mxu0 0.0
        %1242 = vmatprep.subr.mxu0 0.0
        %1243 = vmatpush1.msra.mxu0 0.0
        %1244 = vmatprep.subr.mxu0 0.0
        %1245 = vmatpush1.msra.mxu0 0.0
        %1246 = vmatprep.subr.mxu0 0.0
        %1247 = vmatpush1.msra.mxu0 0.0
        %1248 = vmatprep.subr.mxu0 0.0
        %1249 = vmatpush1.msra.mxu0 0.0
        %1250 = vmatprep.subr.mxu0 0.0
        %1251 = vmatpush1.msra.mxu0 0.0
        %1252 = vmatprep.subr.mxu0 0.0
        %1253 = vmatpush1.msra.mxu0 0.0
        %1254 = vmatprep.subr.mxu0 0.0
        %1255 = vmatpush1.msra.mxu0 0.0
        %1256 = vmatprep.subr.mxu0 0.0
        %1257 = vmatpush1.msra.mxu0 %v762
        %1258 = vmatprep.subr.mxu0 0.0
        %1259 = vmatpush1.msra.mxu0 %v761
        %1260 = vmatprep.subr.mxu0 0.0
        %1261 = vmatpush1.msra.mxu0 %v760
        %1262 = vmatprep.subr.mxu0 0.0
        %1263 = vmatpush1.msra.mxu0 %v759
        %1264 = vmatprep.subr.mxu0 0.0
        %1265 = vmatpush2.msra.mxu0 0.0
        %1266 = vmatprep.subr.mxu0 0.0
        %1267 = vmatpush2.msra.mxu0 0.0
        %1268 = vmatprep.subr.mxu0 0.0
        %1269 = vmatpush2.msra.mxu0 0.0
        %1270 = vmatprep.subr.mxu0 0.0
        %1271 = vmatpush2.msra.mxu0 0.0
        %1272 = vmatprep.subr.mxu0 0.0
        %1273 = vmatpush2.msra.mxu0 0.0
        %1274 = vmatprep.subr.mxu0 0.0
        %1275 = vmatpush2.msra.mxu0 0.0
        %1276 = vmatprep.subr.mxu0 0.0
        %1277 = vmatpush2.msra.mxu0 0.0
        %1278 = vmatprep.subr.mxu0 0.0
        %1279 = vmatpush2.msra.mxu0 0.0
        %1280 = vmatprep.subr.mxu0 0.0
        %1281 = vmatpush2.msra.mxu0 0.0
        %1282 = vmatprep.subr.mxu0 0.0
        %1283 = vmatpush2.msra.mxu0 0.0
        %1284 = vmatprep.subr.mxu0 0.0
        %1285 = vmatpush2.msra.mxu0 0.0
        %1286 = vmatprep.subr.mxu0 0.0
        %1287 = vmatpush2.msra.mxu0 0.0
        %1288 = vmatprep.subr.mxu0 0.0
        %1289 = vmatpush2.msra.mxu0 0.0
        %1290 = vmatprep.subr.mxu0 0.0
        %1291 = vmatpush2.msra.mxu0 0.0
        %1292 = vmatprep.subr.mxu0 0.0
        %1293 = vmatpush2.msra.mxu0 0.0
        %1294 = vmatprep.subr.mxu0 0.0
        %1295 = vmatpush2.msra.mxu0 0.0
        %1296 = vmatprep.mubr.f32.mxu0 0.0
        %1297 = vmatmul.mubr.f32.gmra.mxu0 %v1168
        %v1298 = vpop.f32.mrf.mxu0
        %v1299 = vadd.f32 %v1010, %v1298
        %v1300 = vpop.f32.mrf.mxu0
        %1301 = vmatprep.mubr.f32.mxu0 0.0
        %1302 = vmatmul.mubr.f32.gmra.mxu0 %v1170
        %v1303 = vpop.f32.mrf.mxu0
        %v1304 = vadd.f32 %v1015, %v1303
        %v1305 = vpop.f32.mrf.mxu0
        %1306 = vmatprep.mubr.f32.mxu0 0.0
        %1307 = vmatmul.mubr.f32.gmra.mxu0 %v1172
        %v1308 = vpop.f32.mrf.mxu0
        %v1309 = vadd.f32 %v1020, %v1308
        %v1310 = vpop.f32.mrf.mxu0
        %1311 = vmatprep.mubr.f32.mxu0 0.0
        %1312 = vmatmul.mubr.f32.gmra.mxu0 %v1174
        %v1313 = vpop.f32.mrf.mxu0
        %v1314 = vadd.f32 %v1025, %v1313
        %v1315 = vpop.f32.mrf.mxu0
        %1316 = vmatprep.mubr.f32.mxu0 0.0
        %1317 = vmatmul.mubr.f32.gmra.mxu0 %v1176
        %v1318 = vpop.f32.mrf.mxu0
        %v1319 = vadd.f32 %v1030, %v1318
        %v1320 = vpop.f32.mrf.mxu0
        %1321 = vmatprep.mubr.f32.mxu0 0.0
        %1322 = vmatmul.mubr.f32.gmra.mxu0 %v1178
        %v1323 = vpop.f32.mrf.mxu0
        %v1324 = vadd.f32 %v1035, %v1323
        %v1325 = vpop.f32.mrf.mxu0
        %1326 = vmatprep.mubr.f32.mxu0 0.0
        %1327 = vmatmul.mubr.f32.gmra.mxu0 %v1180
        %v1328 = vpop.f32.mrf.mxu0
        %v1329 = vadd.f32 %v1040, %v1328
        %v1330 = vpop.f32.mrf.mxu0
        %1331 = vmatprep.mubr.f32.mxu0 0.0
        %1332 = vmatmul.mubr.f32.gmra.mxu0 %v1182
        %v1333 = vpop.f32.mrf.mxu0
        %v1334 = vadd.f32 %v1045, %v1333
        %v1335 = vpop.f32.mrf.mxu0
        %1336 = vmatprep.mubr.f32.mxu0 0.0
        %1337 = vmatmul.mubr.f32.gmra.mxu0 %v1184
        %v1338 = vpop.f32.mrf.mxu0
        %v1339 = vadd.f32 %v1050, %v1338
        %v1340 = vpop.f32.mrf.mxu0
        %1341 = vmatprep.mubr.f32.mxu0 0.0
        %1342 = vmatmul.mubr.f32.gmra.mxu0 %v1186
        %v1343 = vpop.f32.mrf.mxu0
        %v1344 = vadd.f32 %v1055, %v1343
        %v1345 = vpop.f32.mrf.mxu0
        %1346 = vmatprep.mubr.f32.mxu0 0.0
        %1347 = vmatmul.mubr.f32.gmra.mxu0 %v1188
        %v1348 = vpop.f32.mrf.mxu0
        %v1349 = vadd.f32 %v1060, %v1348
        %v1350 = vpop.f32.mrf.mxu0
        %1351 = vmatprep.mubr.f32.mxu0 0.0
        %1352 = vmatmul.mubr.f32.gmra.mxu0 %v1190
        %v1353 = vpop.f32.mrf.mxu0
        %v1354 = vadd.f32 %v1065, %v1353
        %v1355 = vpop.f32.mrf.mxu0
        %1356 = vmatprep.mubr.f32.mxu0 0.0
        %1357 = vmatmul.mubr.f32.gmra.mxu0 %v1192
        %v1358 = vpop.f32.mrf.mxu0
        %v1359 = vadd.f32 %v1070, %v1358
        %v1360 = vpop.f32.mrf.mxu0
        %1361 = vmatprep.mubr.f32.mxu0 0.0
        %1362 = vmatmul.mubr.f32.gmra.mxu0 %v1194
        %v1363 = vpop.f32.mrf.mxu0
        %v1364 = vadd.f32 %v1075, %v1363
        %v1365 = vpop.f32.mrf.mxu0
        %1366 = vmatprep.mubr.f32.mxu0 0.0
        %1367 = vmatmul.mubr.f32.gmra.mxu0 %v1196
        %v1368 = vpop.f32.mrf.mxu0
        %v1369 = vadd.f32 %v1080, %v1368
        %v1370 = vpop.f32.mrf.mxu0
        %1371 = vmatprep.mubr.f32.mxu0 0.0
        %1372 = vmatmul.mubr.f32.gmra.mxu0 %v1198
        %v1373 = vpop.f32.mrf.mxu0
        %v1374 = vadd.f32 %v1085, %v1373
        %v1375 = vpop.f32.mrf.mxu0
        %1376 = vmatprep.mubr.f32.mxu0 0.0
        %1377 = vmatmul.mubr.f32.gmra.mxu0 %v1200
        %v1378 = vpop.f32.mrf.mxu0
        %v1379 = vadd.f32 %v1090, %v1378
        %v1380 = vpop.f32.mrf.mxu0
        %1381 = vmatprep.mubr.f32.mxu0 0.0
        %1382 = vmatmul.mubr.f32.gmra.mxu0 %v1202
        %v1383 = vpop.f32.mrf.mxu0
        %v1384 = vadd.f32 %v1095, %v1383
        %v1385 = vpop.f32.mrf.mxu0
        %1386 = vmatprep.mubr.f32.mxu0 0.0
        %1387 = vmatmul.mubr.f32.gmra.mxu0 %v1204
        %v1388 = vpop.f32.mrf.mxu0
        %v1389 = vadd.f32 %v1100, %v1388
        %v1390 = vpop.f32.mrf.mxu0
        %1391 = vmatprep.mubr.f32.mxu0 0.0
        %1392 = vmatmul.mubr.f32.gmra.mxu0 %v1206
        %v1393 = vpop.f32.mrf.mxu0
        %v1394 = vadd.f32 %v1105, %v1393
        %v1395 = vpop.f32.mrf.mxu0
        %1396 = vmatprep.mubr.f32.mxu0 0.0
        %1397 = vmatmul.mubr.f32.gmra.mxu0 %v1208
        %v1398 = vpop.f32.mrf.mxu0
        %v1399 = vadd.f32 %v1110, %v1398
        %v1400 = vpop.f32.mrf.mxu0
        %1401 = vmatprep.mubr.f32.mxu0 0.0
        %1402 = vmatmul.mubr.f32.gmra.mxu0 %v1210
        %v1403 = vpop.f32.mrf.mxu0
        %v1404 = vadd.f32 %v1115, %v1403
        %v1405 = vpop.f32.mrf.mxu0
        %1406 = vmatprep.mubr.f32.mxu0 0.0
        %1407 = vmatmul.mubr.f32.gmra.mxu0 %v1212
        %v1408 = vpop.f32.mrf.mxu0
        %v1409 = vadd.f32 %v1120, %v1408
        %v1410 = vpop.f32.mrf.mxu0
        %1411 = vmatprep.mubr.f32.mxu0 0.0
        %1412 = vmatmul.mubr.f32.gmra.mxu0 %v1214
        %v1413 = vpop.f32.mrf.mxu0
        %v1414 = vadd.f32 %v1125, %v1413
        %v1415 = vpop.f32.mrf.mxu0
        %1416 = vmatprep.mubr.f32.mxu0 0.0
        %1417 = vmatmul.mubr.f32.gmra.mxu0 %v1216
        %v1418 = vpop.f32.mrf.mxu0
        %v1419 = vadd.f32 %v1130, %v1418
        %v1420 = vpop.f32.mrf.mxu0
        %1421 = vmatprep.mubr.f32.mxu0 0.0
        %1422 = vmatmul.mubr.f32.gmra.mxu0 %v1218
        %v1423 = vpop.f32.mrf.mxu0
        %v1424 = vadd.f32 %v1135, %v1423
        %v1425 = vpop.f32.mrf.mxu0
        %1426 = vmatprep.mubr.f32.mxu0 0.0
        %1427 = vmatmul.mubr.f32.gmra.mxu0 %v1220
        %v1428 = vpop.f32.mrf.mxu0
        %v1429 = vadd.f32 %v1140, %v1428
        %v1430 = vpop.f32.mrf.mxu0
        %1431 = vmatprep.mubr.f32.mxu0 0.0
        %1432 = vmatmul.mubr.f32.gmra.mxu0 %v1222
        %v1433 = vpop.f32.mrf.mxu0
        %v1434 = vadd.f32 %v1145, %v1433
        %v1435 = vpop.f32.mrf.mxu0
        %1436 = vmatprep.mubr.f32.mxu0 0.0
        %1437 = vmatmul.mubr.f32.gmra.mxu0 %v1224
        %v1438 = vpop.f32.mrf.mxu0
        %v1439 = vadd.f32 %v1150, %v1438
        %v1440 = vpop.f32.mrf.mxu0
        %1441 = vmatprep.mubr.f32.mxu0 0.0
        %1442 = vmatmul.mubr.f32.gmra.mxu0 %v1226
        %v1443 = vpop.f32.mrf.mxu0
        %v1444 = vadd.f32 %v1155, %v1443
        %v1445 = vpop.f32.mrf.mxu0
        %1446 = vmatprep.mubr.f32.mxu0 0.0
        %1447 = vmatmul.mubr.f32.gmra.mxu0 %v1228
        %v1448 = vpop.f32.mrf.mxu0
        %v1449 = vadd.f32 %v1160, %v1448
        %v1450 = vpop.f32.mrf.mxu0
        %1451 = vmatprep.mubr.f32.mxu0 0.0
        %1452 = vmatmul.mubr.f32.gmra.mxu0 %v1230
        %v1453 = vpop.f32.mrf.mxu0
        %v1454 = vadd.f32 %v1165, %v1453
        %v1455 = vpop.f32.mrf.mxu0
        %1456 = vdwg.mxu0
        %vm1457 = vcmask 1045504
        %v1458 = vrot.slane %v596, 2
        %v1459 = vrot.slane %v601, 2
        %v1460 = vsel %vm1457, %v1458, %v1459
        %v1461 = vrot.slane %v606, 2
        %v1462 = vsel %vm1457, %v1459, %v1461
        %v1463 = vrot.slane %v611, 2
        %v1464 = vsel %vm1457, %v1461, %v1463
        %v1465 = vrot.slane %v616, 2
        %v1466 = vsel %vm1457, %v1463, %v1465
        %v1467 = vrot.slane %v621, 2
        %v1468 = vsel %vm1457, %v1465, %v1467
        %v1469 = vrot.slane %v626, 2
        %v1470 = vsel %vm1457, %v1467, %v1469
        %v1471 = vrot.slane %v631, 2
        %v1472 = vsel %vm1457, %v1469, %v1471
        %v1473 = vrot.slane %v636, 2
        %v1474 = vsel %vm1457, %v1471, %v1473
        %v1475 = vrot.slane %v641, 2
        %v1476 = vsel %vm1457, %v1473, %v1475
        %v1477 = vrot.slane %v646, 2
        %v1478 = vsel %vm1457, %v1475, %v1477
        %v1479 = vrot.slane %v651, 2
        %v1480 = vsel %vm1457, %v1477, %v1479
        %v1481 = vrot.slane %v656, 2
        %v1482 = vsel %vm1457, %v1479, %v1481
        %v1483 = vrot.slane %v661, 2
        %v1484 = vsel %vm1457, %v1481, %v1483
        %v1485 = vrot.slane %v666, 2
        %v1486 = vsel %vm1457, %v1483, %v1485
        %v1487 = vrot.slane %v671, 2
        %v1488 = vsel %vm1457, %v1485, %v1487
        %v1489 = vrot.slane %v676, 2
        %v1490 = vsel %vm1457, %v1487, %v1489
        %v1491 = vrot.slane %v681, 2
        %v1492 = vsel %vm1457, %v1489, %v1491
        %v1493 = vrot.slane %v686, 2
        %v1494 = vsel %vm1457, %v1491, %v1493
        %v1495 = vrot.slane %v691, 2
        %v1496 = vsel %vm1457, %v1493, %v1495
        %v1497 = vrot.slane %v696, 2
        %v1498 = vsel %vm1457, %v1495, %v1497
        %v1499 = vrot.slane %v701, 2
        %v1500 = vsel %vm1457, %v1497, %v1499
        %v1501 = vrot.slane %v706, 2
        %v1502 = vsel %vm1457, %v1499, %v1501
        %v1503 = vrot.slane %v711, 2
        %v1504 = vsel %vm1457, %v1501, %v1503
        %v1505 = vrot.slane %v716, 2
        %v1506 = vsel %vm1457, %v1503, %v1505
        %v1507 = vrot.slane %v721, 2
        %v1508 = vsel %vm1457, %v1505, %v1507
        %v1509 = vrot.slane %v726, 2
        %v1510 = vsel %vm1457, %v1507, %v1509
        %v1511 = vrot.slane %v731, 2
        %v1512 = vsel %vm1457, %v1509, %v1511
        %v1513 = vrot.slane %v736, 2
        %v1514 = vsel %vm1457, %v1511, %v1513
        %v1515 = vrot.slane %v741, 2
        %v1516 = vsel %vm1457, %v1513, %v1515
        %v1517 = vrot.slane %v746, 2
        %v1518 = vsel %vm1457, %v1515, %v1517
        %v1519 = vrot.slane %v751, 2
        %v1520 = vsel %vm1457, %v1517, %v1519
        %v1521 = vrot.slane %v756, 2
        %v1522 = vsel %vm1457, %v1519, %v1521
        %v1523 = vsel %vm878, %v1460, 0
        %v1525 = vsel %vm878, %v1462, 0
        %v1527 = vsel %vm878, %v1464, 0
        %v1529 = vsel %vm878, %v1466, 0
        %v1531 = vsel %vm878, %v1468, 0
        %v1533 = vsel %vm878, %v1470, 0
        %v1535 = vsel %vm878, %v1472, 0
        %v1537 = vsel %vm878, %v1474, 0
        %v1539 = vsel %vm878, %v1476, 0
        %v1541 = vsel %vm878, %v1478, 0
        %v1543 = vsel %vm878, %v1480, 0
        %v1545 = vsel %vm878, %v1482, 0
        %v1547 = vsel %vm878, %v1484, 0
        %v1549 = vsel %vm878, %v1486, 0
        %v1551 = vsel %vm878, %v1488, 0
        %v1553 = vsel %vm878, %v1490, 0
        %v1555 = vsel %vm878, %v1492, 0
        %v1557 = vsel %vm878, %v1494, 0
        %v1559 = vsel %vm878, %v1496, 0
        %v1561 = vsel %vm878, %v1498, 0
        %v1563 = vsel %vm878, %v1500, 0
        %v1565 = vsel %vm878, %v1502, 0
        %v1567 = vsel %vm878, %v1504, 0
        %v1569 = vsel %vm878, %v1506, 0
        %v1571 = vsel %vm878, %v1508, 0
        %v1573 = vsel %vm878, %v1510, 0
        %v1575 = vsel %vm878, %v1512, 0
        %v1577 = vsel %vm878, %v1514, 0
        %v1579 = vsel %vm878, %v1516, 0
        %v1581 = vsel %vm878, %v1518, 0
        %v1583 = vsel %vm878, %v1520, 0
        %v1585 = vsel %vm878, %v1522, 0
        %1587 = vmatprep.subr.mxu0 0.0
        %1588 = vmatpush1.msra.mxu0 0.0
        %1589 = vmatprep.subr.mxu0 0.0
        %1590 = vmatpush1.msra.mxu0 0.0
        %1591 = vmatprep.subr.mxu0 0.0
        %1592 = vmatpush1.msra.mxu0 0.0
        %1593 = vmatprep.subr.mxu0 0.0
        %1594 = vmatpush1.msra.mxu0 0.0
        %1595 = vmatprep.subr.mxu0 0.0
        %1596 = vmatpush1.msra.mxu0 0.0
        %1597 = vmatprep.subr.mxu0 0.0
        %1598 = vmatpush1.msra.mxu0 0.0
        %1599 = vmatprep.subr.mxu0 0.0
        %1600 = vmatpush1.msra.mxu0 0.0
        %1601 = vmatprep.subr.mxu0 0.0
        %1602 = vmatpush1.msra.mxu0 0.0
        %1603 = vmatprep.subr.mxu0 0.0
        %1604 = vmatpush1.msra.mxu0 0.0
        %1605 = vmatprep.subr.mxu0 0.0
        %1606 = vmatpush1.msra.mxu0 0.0
        %1607 = vmatprep.subr.mxu0 0.0
        %1608 = vmatpush1.msra.mxu0 0.0
        %1609 = vmatprep.subr.mxu0 0.0
        %1610 = vmatpush1.msra.mxu0 0.0
        %1611 = vmatprep.subr.mxu0 0.0
        %1612 = vmatpush1.msra.mxu0 %v770
        %1613 = vmatprep.subr.mxu0 0.0
        %1614 = vmatpush1.msra.mxu0 %v769
        %1615 = vmatprep.subr.mxu0 0.0
        %1616 = vmatpush1.msra.mxu0 %v768
        %1617 = vmatprep.subr.mxu0 0.0
        %1618 = vmatpush1.msra.mxu0 %v767
        %1619 = vmatprep.subr.mxu0 0.0
        %1620 = vmatpush2.msra.mxu0 0.0
        %1621 = vmatprep.subr.mxu0 0.0
        %1622 = vmatpush2.msra.mxu0 0.0
        %1623 = vmatprep.subr.mxu0 0.0
        %1624 = vmatpush2.msra.mxu0 0.0
        %1625 = vmatprep.subr.mxu0 0.0
        %1626 = vmatpush2.msra.mxu0 0.0
        %1627 = vmatprep.subr.mxu0 0.0
        %1628 = vmatpush2.msra.mxu0 0.0
        %1629 = vmatprep.subr.mxu0 0.0
        %1630 = vmatpush2.msra.mxu0 0.0
        %1631 = vmatprep.subr.mxu0 0.0
        %1632 = vmatpush2.msra.mxu0 0.0
        %1633 = vmatprep.subr.mxu0 0.0
        %1634 = vmatpush2.msra.mxu0 0.0
        %1635 = vmatprep.subr.mxu0 0.0
        %1636 = vmatpush2.msra.mxu0 0.0
        %1637 = vmatprep.subr.mxu0 0.0
        %1638 = vmatpush2.msra.mxu0 0.0
        %1639 = vmatprep.subr.mxu0 0.0
        %1640 = vmatpush2.msra.mxu0 0.0
        %1641 = vmatprep.subr.mxu0 0.0
        %1642 = vmatpush2.msra.mxu0 0.0
        %1643 = vmatprep.subr.mxu0 0.0
        %1644 = vmatpush2.msra.mxu0 0.0
        %1645 = vmatprep.subr.mxu0 0.0
        %1646 = vmatpush2.msra.mxu0 0.0
        %1647 = vmatprep.subr.mxu0 0.0
        %1648 = vmatpush2.msra.mxu0 0.0
        %1649 = vmatprep.subr.mxu0 0.0
        %1650 = vmatpush2.msra.mxu0 0.0
        %1651 = vmatprep.mubr.f32.mxu0 0.0
        %1652 = vmatmul.mubr.f32.gmra.mxu0 %v1523
        %v1653 = vpop.f32.mrf.mxu0
        %v1654 = vadd.f32 0.0, %v1653
        %v1655 = vpop.f32.mrf.mxu0
        %1656 = vmatprep.mubr.f32.mxu0 0.0
        %1657 = vmatmul.mubr.f32.gmra.mxu0 %v1525
        %v1658 = vpop.f32.mrf.mxu0
        %v1659 = vadd.f32 0.0, %v1658
        %v1660 = vpop.f32.mrf.mxu0
        %1661 = vmatprep.mubr.f32.mxu0 0.0
        %1662 = vmatmul.mubr.f32.gmra.mxu0 %v1527
        %v1663 = vpop.f32.mrf.mxu0
        %v1664 = vadd.f32 0.0, %v1663
        %v1665 = vpop.f32.mrf.mxu0
        %1666 = vmatprep.mubr.f32.mxu0 0.0
        %1667 = vmatmul.mubr.f32.gmra.mxu0 %v1529
        %v1668 = vpop.f32.mrf.mxu0
        %v1669 = vadd.f32 0.0, %v1668
        %v1670 = vpop.f32.mrf.mxu0
        %1671 = vmatprep.mubr.f32.mxu0 0.0
        %1672 = vmatmul.mubr.f32.gmra.mxu0 %v1531
        %v1673 = vpop.f32.mrf.mxu0
        %v1674 = vadd.f32 0.0, %v1673
        %v1675 = vpop.f32.mrf.mxu0
        %1676 = vmatprep.mubr.f32.mxu0 0.0
        %1677 = vmatmul.mubr.f32.gmra.mxu0 %v1533
        %v1678 = vpop.f32.mrf.mxu0
        %v1679 = vadd.f32 0.0, %v1678
        %v1680 = vpop.f32.mrf.mxu0
        %1681 = vmatprep.mubr.f32.mxu0 0.0
        %1682 = vmatmul.mubr.f32.gmra.mxu0 %v1535
        %v1683 = vpop.f32.mrf.mxu0
        %v1684 = vadd.f32 0.0, %v1683
        %v1685 = vpop.f32.mrf.mxu0
        %1686 = vmatprep.mubr.f32.mxu0 0.0
        %1687 = vmatmul.mubr.f32.gmra.mxu0 %v1537
        %v1688 = vpop.f32.mrf.mxu0
        %v1689 = vadd.f32 0.0, %v1688
        %v1690 = vpop.f32.mrf.mxu0
        %1691 = vmatprep.mubr.f32.mxu0 0.0
        %1692 = vmatmul.mubr.f32.gmra.mxu0 %v1539
        %v1693 = vpop.f32.mrf.mxu0
        %v1694 = vadd.f32 0.0, %v1693
        %v1695 = vpop.f32.mrf.mxu0
        %1696 = vmatprep.mubr.f32.mxu0 0.0
        %1697 = vmatmul.mubr.f32.gmra.mxu0 %v1541
        %v1698 = vpop.f32.mrf.mxu0
        %v1699 = vadd.f32 0.0, %v1698
        %v1700 = vpop.f32.mrf.mxu0
        %1701 = vmatprep.mubr.f32.mxu0 0.0
        %1702 = vmatmul.mubr.f32.gmra.mxu0 %v1543
        %v1703 = vpop.f32.mrf.mxu0
        %v1704 = vadd.f32 0.0, %v1703
        %v1705 = vpop.f32.mrf.mxu0
        %1706 = vmatprep.mubr.f32.mxu0 0.0
        %1707 = vmatmul.mubr.f32.gmra.mxu0 %v1545
        %v1708 = vpop.f32.mrf.mxu0
        %v1709 = vadd.f32 0.0, %v1708
        %v1710 = vpop.f32.mrf.mxu0
        %1711 = vmatprep.mubr.f32.mxu0 0.0
        %1712 = vmatmul.mubr.f32.gmra.mxu0 %v1547
        %v1713 = vpop.f32.mrf.mxu0
        %v1714 = vadd.f32 0.0, %v1713
        %v1715 = vpop.f32.mrf.mxu0
        %1716 = vmatprep.mubr.f32.mxu0 0.0
        %1717 = vmatmul.mubr.f32.gmra.mxu0 %v1549
        %v1718 = vpop.f32.mrf.mxu0
        %v1719 = vadd.f32 0.0, %v1718
        %v1720 = vpop.f32.mrf.mxu0
        %1721 = vmatprep.mubr.f32.mxu0 0.0
        %1722 = vmatmul.mubr.f32.gmra.mxu0 %v1551
        %v1723 = vpop.f32.mrf.mxu0
        %v1724 = vadd.f32 0.0, %v1723
        %v1725 = vpop.f32.mrf.mxu0
        %1726 = vmatprep.mubr.f32.mxu0 0.0
        %1727 = vmatmul.mubr.f32.gmra.mxu0 %v1553
        %v1728 = vpop.f32.mrf.mxu0
        %v1729 = vadd.f32 0.0, %v1728
        %v1730 = vpop.f32.mrf.mxu0
        %1731 = vmatprep.mubr.f32.mxu0 0.0
        %1732 = vmatmul.mubr.f32.gmra.mxu0 %v1555
        %v1733 = vpop.f32.mrf.mxu0
        %v1734 = vadd.f32 0.0, %v1733
        %v1735 = vpop.f32.mrf.mxu0
        %1736 = vmatprep.mubr.f32.mxu0 0.0
        %1737 = vmatmul.mubr.f32.gmra.mxu0 %v1557
        %v1738 = vpop.f32.mrf.mxu0
        %v1739 = vadd.f32 0.0, %v1738
        %v1740 = vpop.f32.mrf.mxu0
        %1741 = vmatprep.mubr.f32.mxu0 0.0
        %1742 = vmatmul.mubr.f32.gmra.mxu0 %v1559
        %v1743 = vpop.f32.mrf.mxu0
        %v1744 = vadd.f32 0.0, %v1743
        %v1745 = vpop.f32.mrf.mxu0
        %1746 = vmatprep.mubr.f32.mxu0 0.0
        %1747 = vmatmul.mubr.f32.gmra.mxu0 %v1561
        %v1748 = vpop.f32.mrf.mxu0
        %v1749 = vadd.f32 0.0, %v1748
        %v1750 = vpop.f32.mrf.mxu0
        %1751 = vmatprep.mubr.f32.mxu0 0.0
        %1752 = vmatmul.mubr.f32.gmra.mxu0 %v1563
        %v1753 = vpop.f32.mrf.mxu0
        %v1754 = vadd.f32 0.0, %v1753
        %v1755 = vpop.f32.mrf.mxu0
        %1756 = vmatprep.mubr.f32.mxu0 0.0
        %1757 = vmatmul.mubr.f32.gmra.mxu0 %v1565
        %v1758 = vpop.f32.mrf.mxu0
        %v1759 = vadd.f32 0.0, %v1758
        %v1760 = vpop.f32.mrf.mxu0
        %1761 = vmatprep.mubr.f32.mxu0 0.0
        %1762 = vmatmul.mubr.f32.gmra.mxu0 %v1567
        %v1763 = vpop.f32.mrf.mxu0
        %v1764 = vadd.f32 0.0, %v1763
        %v1765 = vpop.f32.mrf.mxu0
        %1766 = vmatprep.mubr.f32.mxu0 0.0
        %1767 = vmatmul.mubr.f32.gmra.mxu0 %v1569
        %v1768 = vpop.f32.mrf.mxu0
        %v1769 = vadd.f32 0.0, %v1768
        %v1770 = vpop.f32.mrf.mxu0
        %1771 = vmatprep.mubr.f32.mxu0 0.0
        %1772 = vmatmul.mubr.f32.gmra.mxu0 %v1571
        %v1773 = vpop.f32.mrf.mxu0
        %v1774 = vadd.f32 0.0, %v1773
        %v1775 = vpop.f32.mrf.mxu0
        %1776 = vmatprep.mubr.f32.mxu0 0.0
        %1777 = vmatmul.mubr.f32.gmra.mxu0 %v1573
        %v1778 = vpop.f32.mrf.mxu0
        %v1779 = vadd.f32 0.0, %v1778
        %v1780 = vpop.f32.mrf.mxu0
        %1781 = vmatprep.mubr.f32.mxu0 0.0
        %1782 = vmatmul.mubr.f32.gmra.mxu0 %v1575
        %v1783 = vpop.f32.mrf.mxu0
        %v1784 = vadd.f32 0.0, %v1783
        %v1785 = vpop.f32.mrf.mxu0
        %1786 = vmatprep.mubr.f32.mxu0 0.0
        %1787 = vmatmul.mubr.f32.gmra.mxu0 %v1577
        %v1788 = vpop.f32.mrf.mxu0
        %v1789 = vadd.f32 0.0, %v1788
        %v1790 = vpop.f32.mrf.mxu0
        %1791 = vmatprep.mubr.f32.mxu0 0.0
        %1792 = vmatmul.mubr.f32.gmra.mxu0 %v1579
        %v1793 = vpop.f32.mrf.mxu0
        %v1794 = vadd.f32 0.0, %v1793
        %v1795 = vpop.f32.mrf.mxu0
        %1796 = vmatprep.mubr.f32.mxu0 0.0
        %1797 = vmatmul.mubr.f32.gmra.mxu0 %v1581
        %v1798 = vpop.f32.mrf.mxu0
        %v1799 = vadd.f32 0.0, %v1798
        %v1800 = vpop.f32.mrf.mxu0
        %1801 = vmatprep.mubr.f32.mxu0 0.0
        %1802 = vmatmul.mubr.f32.gmra.mxu0 %v1583
        %v1803 = vpop.f32.mrf.mxu0
        %v1804 = vadd.f32 0.0, %v1803
        %v1805 = vpop.f32.mrf.mxu0
        %1806 = vmatprep.mubr.f32.mxu0 0.0
        %1807 = vmatmul.mubr.f32.gmra.mxu0 %v1585
        %v1808 = vpop.f32.mrf.mxu0
        %v1809 = vadd.f32 0.0, %v1808
        %v1810 = vpop.f32.mrf.mxu0
        %1811 = vdwg.mxu0
        %v1812 = vadd.f32 %v1299, %v1654
        %v1813 = vadd.f32 %v1304, %v1659
        %v1814 = vadd.f32 %v1309, %v1664
        %v1815 = vadd.f32 %v1314, %v1669
        %v1816 = vadd.f32 %v1319, %v1674
        %v1817 = vadd.f32 %v1324, %v1679
        %v1818 = vadd.f32 %v1329, %v1684
        %v1819 = vadd.f32 %v1334, %v1689
        %v1820 = vadd.f32 %v1339, %v1694
        %v1821 = vadd.f32 %v1344, %v1699
        %v1822 = vadd.f32 %v1349, %v1704
        %v1823 = vadd.f32 %v1354, %v1709
        %v1824 = vadd.f32 %v1359, %v1714
        %v1825 = vadd.f32 %v1364, %v1719
        %v1826 = vadd.f32 %v1369, %v1724
        %v1827 = vadd.f32 %v1374, %v1729
        %v1828 = vadd.f32 %v1379, %v1734
        %v1829 = vadd.f32 %v1384, %v1739
        %v1830 = vadd.f32 %v1389, %v1744
        %v1831 = vadd.f32 %v1394, %v1749
        %v1832 = vadd.f32 %v1399, %v1754
        %v1833 = vadd.f32 %v1404, %v1759
        %v1834 = vadd.f32 %v1409, %v1764
        %v1835 = vadd.f32 %v1414, %v1769
        %v1836 = vadd.f32 %v1419, %v1774
        %v1837 = vadd.f32 %v1424, %v1779
        %v1838 = vadd.f32 %v1429, %v1784
        %v1839 = vadd.f32 %v1434, %v1789
        %v1840 = vadd.f32 %v1439, %v1794
        %v1841 = vadd.f32 %v1444, %v1799
        %v1842 = vadd.f32 %v1449, %v1804
        %v1843 = vadd.f32 %v1454, %v1809
        %vm1844 = vcmask 1044480
        %v1845 = vrot.slane %v596, 3
        %v1846 = vrot.slane %v601, 3
        %v1847 = vsel %vm1844, %v1845, %v1846
        %v1848 = vrot.slane %v606, 3
        %v1849 = vsel %vm1844, %v1846, %v1848
        %v1850 = vrot.slane %v611, 3
        %v1851 = vsel %vm1844, %v1848, %v1850
        %v1852 = vrot.slane %v616, 3
        %v1853 = vsel %vm1844, %v1850, %v1852
        %v1854 = vrot.slane %v621, 3
        %v1855 = vsel %vm1844, %v1852, %v1854
        %v1856 = vrot.slane %v626, 3
        %v1857 = vsel %vm1844, %v1854, %v1856
        %v1858 = vrot.slane %v631, 3
        %v1859 = vsel %vm1844, %v1856, %v1858
        %v1860 = vrot.slane %v636, 3
        %v1861 = vsel %vm1844, %v1858, %v1860
        %v1862 = vrot.slane %v641, 3
        %v1863 = vsel %vm1844, %v1860, %v1862
        %v1864 = vrot.slane %v646, 3
        %v1865 = vsel %vm1844, %v1862, %v1864
        %v1866 = vrot.slane %v651, 3
        %v1867 = vsel %vm1844, %v1864, %v1866
        %v1868 = vrot.slane %v656, 3
        %v1869 = vsel %vm1844, %v1866, %v1868
        %v1870 = vrot.slane %v661, 3
        %v1871 = vsel %vm1844, %v1868, %v1870
        %v1872 = vrot.slane %v666, 3
        %v1873 = vsel %vm1844, %v1870, %v1872
        %v1874 = vrot.slane %v671, 3
        %v1875 = vsel %vm1844, %v1872, %v1874
        %v1876 = vrot.slane %v676, 3
        %v1877 = vsel %vm1844, %v1874, %v1876
        %v1878 = vrot.slane %v681, 3
        %v1879 = vsel %vm1844, %v1876, %v1878
        %v1880 = vrot.slane %v686, 3
        %v1881 = vsel %vm1844, %v1878, %v1880
        %v1882 = vrot.slane %v691, 3
        %v1883 = vsel %vm1844, %v1880, %v1882
        %v1884 = vrot.slane %v696, 3
        %v1885 = vsel %vm1844, %v1882, %v1884
        %v1886 = vrot.slane %v701, 3
        %v1887 = vsel %vm1844, %v1884, %v1886
        %v1888 = vrot.slane %v706, 3
        %v1889 = vsel %vm1844, %v1886, %v1888
        %v1890 = vrot.slane %v711, 3
        %v1891 = vsel %vm1844, %v1888, %v1890
        %v1892 = vrot.slane %v716, 3
        %v1893 = vsel %vm1844, %v1890, %v1892
        %v1894 = vrot.slane %v721, 3
        %v1895 = vsel %vm1844, %v1892, %v1894
        %v1896 = vrot.slane %v726, 3
        %v1897 = vsel %vm1844, %v1894, %v1896
        %v1898 = vrot.slane %v731, 3
        %v1899 = vsel %vm1844, %v1896, %v1898
        %v1900 = vrot.slane %v736, 3
        %v1901 = vsel %vm1844, %v1898, %v1900
        %v1902 = vrot.slane %v741, 3
        %v1903 = vsel %vm1844, %v1900, %v1902
        %v1904 = vrot.slane %v746, 3
        %v1905 = vsel %vm1844, %v1902, %v1904
        %v1906 = vrot.slane %v751, 3
        %v1907 = vsel %vm1844, %v1904, %v1906
        %v1908 = vrot.slane %v756, 3
        %v1909 = vsel %vm1844, %v1906, %v1908
        %v1910 = vsel %vm878, %v1847, 0
        %v1912 = vsel %vm878, %v1849, 0
        %v1914 = vsel %vm878, %v1851, 0
        %v1916 = vsel %vm878, %v1853, 0
        %v1918 = vsel %vm878, %v1855, 0
        %v1920 = vsel %vm878, %v1857, 0
        %v1922 = vsel %vm878, %v1859, 0
        %v1924 = vsel %vm878, %v1861, 0
        %v1926 = vsel %vm878, %v1863, 0
        %v1928 = vsel %vm878, %v1865, 0
        %v1930 = vsel %vm878, %v1867, 0
        %v1932 = vsel %vm878, %v1869, 0
        %v1934 = vsel %vm878, %v1871, 0
        %v1936 = vsel %vm878, %v1873, 0
        %v1938 = vsel %vm878, %v1875, 0
        %v1940 = vsel %vm878, %v1877, 0
        %v1942 = vsel %vm878, %v1879, 0
        %v1944 = vsel %vm878, %v1881, 0
        %v1946 = vsel %vm878, %v1883, 0
        %v1948 = vsel %vm878, %v1885, 0
        %v1950 = vsel %vm878, %v1887, 0
        %v1952 = vsel %vm878, %v1889, 0
        %v1954 = vsel %vm878, %v1891, 0
        %v1956 = vsel %vm878, %v1893, 0
        %v1958 = vsel %vm878, %v1895, 0
        %v1960 = vsel %vm878, %v1897, 0
        %v1962 = vsel %vm878, %v1899, 0
        %v1964 = vsel %vm878, %v1901, 0
        %v1966 = vsel %vm878, %v1903, 0
        %v1968 = vsel %vm878, %v1905, 0
        %v1970 = vsel %vm878, %v1907, 0
        %v1972 = vsel %vm878, %v1909, 0
        %1974 = vmatprep.subr.mxu0 0.0
        %1975 = vmatpush1.msra.mxu0 0.0
        %1976 = vmatprep.subr.mxu0 0.0
        %1977 = vmatpush1.msra.mxu0 0.0
        %1978 = vmatprep.subr.mxu0 0.0
        %1979 = vmatpush1.msra.mxu0 0.0
        %1980 = vmatprep.subr.mxu0 0.0
        %1981 = vmatpush1.msra.mxu0 0.0
        %1982 = vmatprep.subr.mxu0 0.0
        %1983 = vmatpush1.msra.mxu0 0.0
        %1984 = vmatprep.subr.mxu0 0.0
        %1985 = vmatpush1.msra.mxu0 0.0
        %1986 = vmatprep.subr.mxu0 0.0
        %1987 = vmatpush1.msra.mxu0 0.0
        %1988 = vmatprep.subr.mxu0 0.0
        %1989 = vmatpush1.msra.mxu0 0.0
        %1990 = vmatprep.subr.mxu0 0.0
        %1991 = vmatpush1.msra.mxu0 0.0
        %1992 = vmatprep.subr.mxu0 0.0
        %1993 = vmatpush1.msra.mxu0 0.0
        %1994 = vmatprep.subr.mxu0 0.0
        %1995 = vmatpush1.msra.mxu0 0.0
        %1996 = vmatprep.subr.mxu0 0.0
        %1997 = vmatpush1.msra.mxu0 0.0
        %1998 = vmatprep.subr.mxu0 0.0
        %1999 = vmatpush1.msra.mxu0 %v774
        %2000 = vmatprep.subr.mxu0 0.0
        %2001 = vmatpush1.msra.mxu0 %v773
        %2002 = vmatprep.subr.mxu0 0.0
        %2003 = vmatpush1.msra.mxu0 %v772
        %2004 = vmatprep.subr.mxu0 0.0
        %2005 = vmatpush1.msra.mxu0 %v771
        %2006 = vmatprep.subr.mxu0 0.0
        %2007 = vmatpush2.msra.mxu0 0.0
        %2008 = vmatprep.subr.mxu0 0.0
        %2009 = vmatpush2.msra.mxu0 0.0
        %2010 = vmatprep.subr.mxu0 0.0
        %2011 = vmatpush2.msra.mxu0 0.0
        %2012 = vmatprep.subr.mxu0 0.0
        %2013 = vmatpush2.msra.mxu0 0.0
        %2014 = vmatprep.subr.mxu0 0.0
        %2015 = vmatpush2.msra.mxu0 0.0
        %2016 = vmatprep.subr.mxu0 0.0
        %2017 = vmatpush2.msra.mxu0 0.0
        %2018 = vmatprep.subr.mxu0 0.0
        %2019 = vmatpush2.msra.mxu0 0.0
        %2020 = vmatprep.subr.mxu0 0.0
        %2021 = vmatpush2.msra.mxu0 0.0
        %2022 = vmatprep.subr.mxu0 0.0
        %2023 = vmatpush2.msra.mxu0 0.0
        %2024 = vmatprep.subr.mxu0 0.0
        %2025 = vmatpush2.msra.mxu0 0.0
        %2026 = vmatprep.subr.mxu0 0.0
        %2027 = vmatpush2.msra.mxu0 0.0
        %2028 = vmatprep.subr.mxu0 0.0
        %2029 = vmatpush2.msra.mxu0 0.0
        %2030 = vmatprep.subr.mxu0 0.0
        %2031 = vmatpush2.msra.mxu0 0.0
        %2032 = vmatprep.subr.mxu0 0.0
        %2033 = vmatpush2.msra.mxu0 0.0
        %2034 = vmatprep.subr.mxu0 0.0
        %2035 = vmatpush2.msra.mxu0 0.0
        %2036 = vmatprep.subr.mxu0 0.0
        %2037 = vmatpush2.msra.mxu0 0.0
        %2038 = vmatprep.mubr.f32.mxu0 0.0
        %2039 = vmatmul.mubr.f32.gmra.mxu0 %v1910
        %v2040 = vpop.f32.mrf.mxu0
        %v2041 = vadd.f32 0.0, %v2040
        %v2042 = vpop.f32.mrf.mxu0
        %2043 = vmatprep.mubr.f32.mxu0 0.0
        %2044 = vmatmul.mubr.f32.gmra.mxu0 %v1912
        %v2045 = vpop.f32.mrf.mxu0
        %v2046 = vadd.f32 0.0, %v2045
        %v2047 = vpop.f32.mrf.mxu0
        %2048 = vmatprep.mubr.f32.mxu0 0.0
        %2049 = vmatmul.mubr.f32.gmra.mxu0 %v1914
        %v2050 = vpop.f32.mrf.mxu0
        %v2051 = vadd.f32 0.0, %v2050
        %v2052 = vpop.f32.mrf.mxu0
        %2053 = vmatprep.mubr.f32.mxu0 0.0
        %2054 = vmatmul.mubr.f32.gmra.mxu0 %v1916
        %v2055 = vpop.f32.mrf.mxu0
        %v2056 = vadd.f32 0.0, %v2055
        %v2057 = vpop.f32.mrf.mxu0
        %2058 = vmatprep.mubr.f32.mxu0 0.0
        %2059 = vmatmul.mubr.f32.gmra.mxu0 %v1918
        %v2060 = vpop.f32.mrf.mxu0
        %v2061 = vadd.f32 0.0, %v2060
        %v2062 = vpop.f32.mrf.mxu0
        %2063 = vmatprep.mubr.f32.mxu0 0.0
        %2064 = vmatmul.mubr.f32.gmra.mxu0 %v1920
        %v2065 = vpop.f32.mrf.mxu0
        %v2066 = vadd.f32 0.0, %v2065
        %v2067 = vpop.f32.mrf.mxu0
        %2068 = vmatprep.mubr.f32.mxu0 0.0
        %2069 = vmatmul.mubr.f32.gmra.mxu0 %v1922
        %v2070 = vpop.f32.mrf.mxu0
        %v2071 = vadd.f32 0.0, %v2070
        %v2072 = vpop.f32.mrf.mxu0
        %2073 = vmatprep.mubr.f32.mxu0 0.0
        %2074 = vmatmul.mubr.f32.gmra.mxu0 %v1924
        %v2075 = vpop.f32.mrf.mxu0
        %v2076 = vadd.f32 0.0, %v2075
        %v2077 = vpop.f32.mrf.mxu0
        %2078 = vmatprep.mubr.f32.mxu0 0.0
        %2079 = vmatmul.mubr.f32.gmra.mxu0 %v1926
        %v2080 = vpop.f32.mrf.mxu0
        %v2081 = vadd.f32 0.0, %v2080
        %v2082 = vpop.f32.mrf.mxu0
        %2083 = vmatprep.mubr.f32.mxu0 0.0
        %2084 = vmatmul.mubr.f32.gmra.mxu0 %v1928
        %v2085 = vpop.f32.mrf.mxu0
        %v2086 = vadd.f32 0.0, %v2085
        %v2087 = vpop.f32.mrf.mxu0
        %2088 = vmatprep.mubr.f32.mxu0 0.0
        %2089 = vmatmul.mubr.f32.gmra.mxu0 %v1930
        %v2090 = vpop.f32.mrf.mxu0
        %v2091 = vadd.f32 0.0, %v2090
        %v2092 = vpop.f32.mrf.mxu0
        %2093 = vmatprep.mubr.f32.mxu0 0.0
        %2094 = vmatmul.mubr.f32.gmra.mxu0 %v1932
        %v2095 = vpop.f32.mrf.mxu0
        %v2096 = vadd.f32 0.0, %v2095
        %v2097 = vpop.f32.mrf.mxu0
        %2098 = vmatprep.mubr.f32.mxu0 0.0
        %2099 = vmatmul.mubr.f32.gmra.mxu0 %v1934
        %v2100 = vpop.f32.mrf.mxu0
        %v2101 = vadd.f32 0.0, %v2100
        %v2102 = vpop.f32.mrf.mxu0
        %2103 = vmatprep.mubr.f32.mxu0 0.0
        %2104 = vmatmul.mubr.f32.gmra.mxu0 %v1936
        %v2105 = vpop.f32.mrf.mxu0
        %v2106 = vadd.f32 0.0, %v2105
        %v2107 = vpop.f32.mrf.mxu0
        %2108 = vmatprep.mubr.f32.mxu0 0.0
        %2109 = vmatmul.mubr.f32.gmra.mxu0 %v1938
        %v2110 = vpop.f32.mrf.mxu0
        %v2111 = vadd.f32 0.0, %v2110
        %v2112 = vpop.f32.mrf.mxu0
        %2113 = vmatprep.mubr.f32.mxu0 0.0
        %2114 = vmatmul.mubr.f32.gmra.mxu0 %v1940
        %v2115 = vpop.f32.mrf.mxu0
        %v2116 = vadd.f32 0.0, %v2115
        %v2117 = vpop.f32.mrf.mxu0
        %2118 = vmatprep.mubr.f32.mxu0 0.0
        %2119 = vmatmul.mubr.f32.gmra.mxu0 %v1942
        %v2120 = vpop.f32.mrf.mxu0
        %v2121 = vadd.f32 0.0, %v2120
        %v2122 = vpop.f32.mrf.mxu0
        %2123 = vmatprep.mubr.f32.mxu0 0.0
        %2124 = vmatmul.mubr.f32.gmra.mxu0 %v1944
        %v2125 = vpop.f32.mrf.mxu0
        %v2126 = vadd.f32 0.0, %v2125
        %v2127 = vpop.f32.mrf.mxu0
        %2128 = vmatprep.mubr.f32.mxu0 0.0
        %2129 = vmatmul.mubr.f32.gmra.mxu0 %v1946
        %v2130 = vpop.f32.mrf.mxu0
        %v2131 = vadd.f32 0.0, %v2130
        %v2132 = vpop.f32.mrf.mxu0
        %2133 = vmatprep.mubr.f32.mxu0 0.0
        %2134 = vmatmul.mubr.f32.gmra.mxu0 %v1948
        %v2135 = vpop.f32.mrf.mxu0
        %v2136 = vadd.f32 0.0, %v2135
        %v2137 = vpop.f32.mrf.mxu0
        %2138 = vmatprep.mubr.f32.mxu0 0.0
        %2139 = vmatmul.mubr.f32.gmra.mxu0 %v1950
        %v2140 = vpop.f32.mrf.mxu0
        %v2141 = vadd.f32 0.0, %v2140
        %v2142 = vpop.f32.mrf.mxu0
        %2143 = vmatprep.mubr.f32.mxu0 0.0
        %2144 = vmatmul.mubr.f32.gmra.mxu0 %v1952
        %v2145 = vpop.f32.mrf.mxu0
        %v2146 = vadd.f32 0.0, %v2145
        %v2147 = vpop.f32.mrf.mxu0
        %2148 = vmatprep.mubr.f32.mxu0 0.0
        %2149 = vmatmul.mubr.f32.gmra.mxu0 %v1954
        %v2150 = vpop.f32.mrf.mxu0
        %v2151 = vadd.f32 0.0, %v2150
        %v2152 = vpop.f32.mrf.mxu0
        %2153 = vmatprep.mubr.f32.mxu0 0.0
        %2154 = vmatmul.mubr.f32.gmra.mxu0 %v1956
        %v2155 = vpop.f32.mrf.mxu0
        %v2156 = vadd.f32 0.0, %v2155
        %v2157 = vpop.f32.mrf.mxu0
        %2158 = vmatprep.mubr.f32.mxu0 0.0
        %2159 = vmatmul.mubr.f32.gmra.mxu0 %v1958
        %v2160 = vpop.f32.mrf.mxu0
        %v2161 = vadd.f32 0.0, %v2160
        %v2162 = vpop.f32.mrf.mxu0
        %2163 = vmatprep.mubr.f32.mxu0 0.0
        %2164 = vmatmul.mubr.f32.gmra.mxu0 %v1960
        %v2165 = vpop.f32.mrf.mxu0
        %v2166 = vadd.f32 0.0, %v2165
        %v2167 = vpop.f32.mrf.mxu0
        %2168 = vmatprep.mubr.f32.mxu0 0.0
        %2169 = vmatmul.mubr.f32.gmra.mxu0 %v1962
        %v2170 = vpop.f32.mrf.mxu0
        %v2171 = vadd.f32 0.0, %v2170
        %v2172 = vpop.f32.mrf.mxu0
        %2173 = vmatprep.mubr.f32.mxu0 0.0
        %2174 = vmatmul.mubr.f32.gmra.mxu0 %v1964
        %v2175 = vpop.f32.mrf.mxu0
        %v2176 = vadd.f32 0.0, %v2175
        %v2177 = vpop.f32.mrf.mxu0
        %2178 = vmatprep.mubr.f32.mxu0 0.0
        %2179 = vmatmul.mubr.f32.gmra.mxu0 %v1966
        %v2180 = vpop.f32.mrf.mxu0
        %v2181 = vadd.f32 0.0, %v2180
        %v2182 = vpop.f32.mrf.mxu0
        %2183 = vmatprep.mubr.f32.mxu0 0.0
        %2184 = vmatmul.mubr.f32.gmra.mxu0 %v1968
        %v2185 = vpop.f32.mrf.mxu0
        %v2186 = vadd.f32 0.0, %v2185
        %v2187 = vpop.f32.mrf.mxu0
        %2188 = vmatprep.mubr.f32.mxu0 0.0
        %2189 = vmatmul.mubr.f32.gmra.mxu0 %v1970
        %v2190 = vpop.f32.mrf.mxu0
        %v2191 = vadd.f32 0.0, %v2190
        %v2192 = vpop.f32.mrf.mxu0
        %2193 = vmatprep.mubr.f32.mxu0 0.0
        %2194 = vmatmul.mubr.f32.gmra.mxu0 %v1972
        %v2195 = vpop.f32.mrf.mxu0
        %v2196 = vadd.f32 0.0, %v2195
        %v2197 = vpop.f32.mrf.mxu0
        %2198 = vdwg.mxu0
        %v2199 = vadd.f32 %v1812, %v2041
        %v2200 = vadd.f32 %v1813, %v2046
        %v2201 = vadd.f32 %v1814, %v2051
        %v2202 = vadd.f32 %v1815, %v2056
        %v2203 = vadd.f32 %v1816, %v2061
        %v2204 = vadd.f32 %v1817, %v2066
        %v2205 = vadd.f32 %v1818, %v2071
        %v2206 = vadd.f32 %v1819, %v2076
        %v2207 = vadd.f32 %v1820, %v2081
        %v2208 = vadd.f32 %v1821, %v2086
        %v2209 = vadd.f32 %v1822, %v2091
        %v2210 = vadd.f32 %v1823, %v2096
        %v2211 = vadd.f32 %v1824, %v2101
        %v2212 = vadd.f32 %v1825, %v2106
        %v2213 = vadd.f32 %v1826, %v2111
        %v2214 = vadd.f32 %v1827, %v2116
        %v2215 = vadd.f32 %v1828, %v2121
        %v2216 = vadd.f32 %v1829, %v2126
        %v2217 = vadd.f32 %v1830, %v2131
        %v2218 = vadd.f32 %v1831, %v2136
        %v2219 = vadd.f32 %v1832, %v2141
        %v2220 = vadd.f32 %v1833, %v2146
        %v2221 = vadd.f32 %v1834, %v2151
        %v2222 = vadd.f32 %v1835, %v2156
        %v2223 = vadd.f32 %v1836, %v2161
        %v2224 = vadd.f32 %v1837, %v2166
        %v2225 = vadd.f32 %v1838, %v2171
        %v2226 = vadd.f32 %v1839, %v2176
        %v2227 = vadd.f32 %v1840, %v2181
        %v2228 = vadd.f32 %v1841, %v2186
        %v2229 = vadd.f32 %v1842, %v2191
        %v2230 = vadd.f32 %v1843, %v2196
        %vm2231 = vcmask 1043456
        %v2232 = vrot.slane %v596, 4
        %v2233 = vrot.slane %v601, 4
        %v2234 = vsel %vm2231, %v2232, %v2233
        %v2235 = vrot.slane %v606, 4
        %v2236 = vsel %vm2231, %v2233, %v2235
        %v2237 = vrot.slane %v611, 4
        %v2238 = vsel %vm2231, %v2235, %v2237
        %v2239 = vrot.slane %v616, 4
        %v2240 = vsel %vm2231, %v2237, %v2239
        %v2241 = vrot.slane %v621, 4
        %v2242 = vsel %vm2231, %v2239, %v2241
        %v2243 = vrot.slane %v626, 4
        %v2244 = vsel %vm2231, %v2241, %v2243
        %v2245 = vrot.slane %v631, 4
        %v2246 = vsel %vm2231, %v2243, %v2245
        %v2247 = vrot.slane %v636, 4
        %v2248 = vsel %vm2231, %v2245, %v2247
        %v2249 = vrot.slane %v641, 4
        %v2250 = vsel %vm2231, %v2247, %v2249
        %v2251 = vrot.slane %v646, 4
        %v2252 = vsel %vm2231, %v2249, %v2251
        %v2253 = vrot.slane %v651, 4
        %v2254 = vsel %vm2231, %v2251, %v2253
        %v2255 = vrot.slane %v656, 4
        %v2256 = vsel %vm2231, %v2253, %v2255
        %v2257 = vrot.slane %v661, 4
        %v2258 = vsel %vm2231, %v2255, %v2257
        %v2259 = vrot.slane %v666, 4
        %v2260 = vsel %vm2231, %v2257, %v2259
        %v2261 = vrot.slane %v671, 4
        %v2262 = vsel %vm2231, %v2259, %v2261
        %v2263 = vrot.slane %v676, 4
        %v2264 = vsel %vm2231, %v2261, %v2263
        %v2265 = vrot.slane %v681, 4
        %v2266 = vsel %vm2231, %v2263, %v2265
        %v2267 = vrot.slane %v686, 4
        %v2268 = vsel %vm2231, %v2265, %v2267
        %v2269 = vrot.slane %v691, 4
        %v2270 = vsel %vm2231, %v2267, %v2269
        %v2271 = vrot.slane %v696, 4
        %v2272 = vsel %vm2231, %v2269, %v2271
        %v2273 = vrot.slane %v701, 4
        %v2274 = vsel %vm2231, %v2271, %v2273
        %v2275 = vrot.slane %v706, 4
        %v2276 = vsel %vm2231, %v2273, %v2275
        %v2277 = vrot.slane %v711, 4
        %v2278 = vsel %vm2231, %v2275, %v2277
        %v2279 = vrot.slane %v716, 4
        %v2280 = vsel %vm2231, %v2277, %v2279
        %v2281 = vrot.slane %v721, 4
        %v2282 = vsel %vm2231, %v2279, %v2281
        %v2283 = vrot.slane %v726, 4
        %v2284 = vsel %vm2231, %v2281, %v2283
        %v2285 = vrot.slane %v731, 4
        %v2286 = vsel %vm2231, %v2283, %v2285
        %v2287 = vrot.slane %v736, 4
        %v2288 = vsel %vm2231, %v2285, %v2287
        %v2289 = vrot.slane %v741, 4
        %v2290 = vsel %vm2231, %v2287, %v2289
        %v2291 = vrot.slane %v746, 4
        %v2292 = vsel %vm2231, %v2289, %v2291
        %v2293 = vrot.slane %v751, 4
        %v2294 = vsel %vm2231, %v2291, %v2293
        %v2295 = vrot.slane %v756, 4
        %v2296 = vsel %vm2231, %v2293, %v2295
        %v2297 = vsel %vm878, %v2234, 0
        %v2299 = vsel %vm878, %v2236, 0
        %v2301 = vsel %vm878, %v2238, 0
        %v2303 = vsel %vm878, %v2240, 0
        %v2305 = vsel %vm878, %v2242, 0
        %v2307 = vsel %vm878, %v2244, 0
        %v2309 = vsel %vm878, %v2246, 0
        %v2311 = vsel %vm878, %v2248, 0
        %v2313 = vsel %vm878, %v2250, 0
        %v2315 = vsel %vm878, %v2252, 0
        %v2317 = vsel %vm878, %v2254, 0
        %v2319 = vsel %vm878, %v2256, 0
        %v2321 = vsel %vm878, %v2258, 0
        %v2323 = vsel %vm878, %v2260, 0
        %v2325 = vsel %vm878, %v2262, 0
        %v2327 = vsel %vm878, %v2264, 0
        %v2329 = vsel %vm878, %v2266, 0
        %v2331 = vsel %vm878, %v2268, 0
        %v2333 = vsel %vm878, %v2270, 0
        %v2335 = vsel %vm878, %v2272, 0
        %v2337 = vsel %vm878, %v2274, 0
        %v2339 = vsel %vm878, %v2276, 0
        %v2341 = vsel %vm878, %v2278, 0
        %v2343 = vsel %vm878, %v2280, 0
        %v2345 = vsel %vm878, %v2282, 0
        %v2347 = vsel %vm878, %v2284, 0
        %v2349 = vsel %vm878, %v2286, 0
        %v2351 = vsel %vm878, %v2288, 0
        %v2353 = vsel %vm878, %v2290, 0
        %v2355 = vsel %vm878, %v2292, 0
        %v2357 = vsel %vm878, %v2294, 0
        %v2359 = vsel %vm878, %v2296, 0
        %2361 = vmatprep.subr.mxu0 0.0
        %2362 = vmatpush1.msra.mxu0 0.0
        %2363 = vmatprep.subr.mxu0 0.0
        %2364 = vmatpush1.msra.mxu0 0.0
        %2365 = vmatprep.subr.mxu0 0.0
        %2366 = vmatpush1.msra.mxu0 0.0
        %2367 = vmatprep.subr.mxu0 0.0
        %2368 = vmatpush1.msra.mxu0 0.0
        %2369 = vmatprep.subr.mxu0 0.0
        %2370 = vmatpush1.msra.mxu0 0.0
        %2371 = vmatprep.subr.mxu0 0.0
        %2372 = vmatpush1.msra.mxu0 0.0
        %2373 = vmatprep.subr.mxu0 0.0
        %2374 = vmatpush1.msra.mxu0 0.0
        %2375 = vmatprep.subr.mxu0 0.0
        %2376 = vmatpush1.msra.mxu0 0.0
        %2377 = vmatprep.subr.mxu0 0.0
        %2378 = vmatpush1.msra.mxu0 0.0
        %2379 = vmatprep.subr.mxu0 0.0
        %2380 = vmatpush1.msra.mxu0 0.0
        %2381 = vmatprep.subr.mxu0 0.0
        %2382 = vmatpush1.msra.mxu0 0.0
        %2383 = vmatprep.subr.mxu0 0.0
        %2384 = vmatpush1.msra.mxu0 0.0
        %2385 = vmatprep.subr.mxu0 0.0
        %2386 = vmatpush1.msra.mxu0 %v778
        %2387 = vmatprep.subr.mxu0 0.0
        %2388 = vmatpush1.msra.mxu0 %v777
        %2389 = vmatprep.subr.mxu0 0.0
        %2390 = vmatpush1.msra.mxu0 %v776
        %2391 = vmatprep.subr.mxu0 0.0
        %2392 = vmatpush1.msra.mxu0 %v775
        %2393 = vmatprep.subr.mxu0 0.0
        %2394 = vmatpush2.msra.mxu0 0.0
        %2395 = vmatprep.subr.mxu0 0.0
        %2396 = vmatpush2.msra.mxu0 0.0
        %2397 = vmatprep.subr.mxu0 0.0
        %2398 = vmatpush2.msra.mxu0 0.0
        %2399 = vmatprep.subr.mxu0 0.0
        %2400 = vmatpush2.msra.mxu0 0.0
        %2401 = vmatprep.subr.mxu0 0.0
        %2402 = vmatpush2.msra.mxu0 0.0
        %2403 = vmatprep.subr.mxu0 0.0
        %2404 = vmatpush2.msra.mxu0 0.0
        %2405 = vmatprep.subr.mxu0 0.0
        %2406 = vmatpush2.msra.mxu0 0.0
        %2407 = vmatprep.subr.mxu0 0.0
        %2408 = vmatpush2.msra.mxu0 0.0
        %2409 = vmatprep.subr.mxu0 0.0
        %2410 = vmatpush2.msra.mxu0 0.0
        %2411 = vmatprep.subr.mxu0 0.0
        %2412 = vmatpush2.msra.mxu0 0.0
        %2413 = vmatprep.subr.mxu0 0.0
        %2414 = vmatpush2.msra.mxu0 0.0
        %2415 = vmatprep.subr.mxu0 0.0
        %2416 = vmatpush2.msra.mxu0 0.0
        %2417 = vmatprep.subr.mxu0 0.0
        %2418 = vmatpush2.msra.mxu0 0.0
        %2419 = vmatprep.subr.mxu0 0.0
        %2420 = vmatpush2.msra.mxu0 0.0
        %2421 = vmatprep.subr.mxu0 0.0
        %2422 = vmatpush2.msra.mxu0 0.0
        %2423 = vmatprep.subr.mxu0 0.0
        %2424 = vmatpush2.msra.mxu0 0.0
        %2425 = vmatprep.mubr.f32.mxu0 0.0
        %2426 = vmatmul.mubr.f32.gmra.mxu0 %v2297
        %v2427 = vpop.f32.mrf.mxu0
        %v2428 = vadd.f32 0.0, %v2427
        %v2429 = vpop.f32.mrf.mxu0
        %2430 = vmatprep.mubr.f32.mxu0 0.0
        %2431 = vmatmul.mubr.f32.gmra.mxu0 %v2299
        %v2432 = vpop.f32.mrf.mxu0
        %v2433 = vadd.f32 0.0, %v2432
        %v2434 = vpop.f32.mrf.mxu0
        %2435 = vmatprep.mubr.f32.mxu0 0.0
        %2436 = vmatmul.mubr.f32.gmra.mxu0 %v2301
        %v2437 = vpop.f32.mrf.mxu0
        %v2438 = vadd.f32 0.0, %v2437
        %v2439 = vpop.f32.mrf.mxu0
        %2440 = vmatprep.mubr.f32.mxu0 0.0
        %2441 = vmatmul.mubr.f32.gmra.mxu0 %v2303
        %v2442 = vpop.f32.mrf.mxu0
        %v2443 = vadd.f32 0.0, %v2442
        %v2444 = vpop.f32.mrf.mxu0
        %2445 = vmatprep.mubr.f32.mxu0 0.0
        %2446 = vmatmul.mubr.f32.gmra.mxu0 %v2305
        %v2447 = vpop.f32.mrf.mxu0
        %v2448 = vadd.f32 0.0, %v2447
        %v2449 = vpop.f32.mrf.mxu0
        %2450 = vmatprep.mubr.f32.mxu0 0.0
        %2451 = vmatmul.mubr.f32.gmra.mxu0 %v2307
        %v2452 = vpop.f32.mrf.mxu0
        %v2453 = vadd.f32 0.0, %v2452
        %v2454 = vpop.f32.mrf.mxu0
        %2455 = vmatprep.mubr.f32.mxu0 0.0
        %2456 = vmatmul.mubr.f32.gmra.mxu0 %v2309
        %v2457 = vpop.f32.mrf.mxu0
        %v2458 = vadd.f32 0.0, %v2457
        %v2459 = vpop.f32.mrf.mxu0
        %2460 = vmatprep.mubr.f32.mxu0 0.0
        %2461 = vmatmul.mubr.f32.gmra.mxu0 %v2311
        %v2462 = vpop.f32.mrf.mxu0
        %v2463 = vadd.f32 0.0, %v2462
        %v2464 = vpop.f32.mrf.mxu0
        %2465 = vmatprep.mubr.f32.mxu0 0.0
        %2466 = vmatmul.mubr.f32.gmra.mxu0 %v2313
        %v2467 = vpop.f32.mrf.mxu0
        %v2468 = vadd.f32 0.0, %v2467
        %v2469 = vpop.f32.mrf.mxu0
        %2470 = vmatprep.mubr.f32.mxu0 0.0
        %2471 = vmatmul.mubr.f32.gmra.mxu0 %v2315
        %v2472 = vpop.f32.mrf.mxu0
        %v2473 = vadd.f32 0.0, %v2472
        %v2474 = vpop.f32.mrf.mxu0
        %2475 = vmatprep.mubr.f32.mxu0 0.0
        %2476 = vmatmul.mubr.f32.gmra.mxu0 %v2317
        %v2477 = vpop.f32.mrf.mxu0
        %v2478 = vadd.f32 0.0, %v2477
        %v2479 = vpop.f32.mrf.mxu0
        %2480 = vmatprep.mubr.f32.mxu0 0.0
        %2481 = vmatmul.mubr.f32.gmra.mxu0 %v2319
        %v2482 = vpop.f32.mrf.mxu0
        %v2483 = vadd.f32 0.0, %v2482
        %v2484 = vpop.f32.mrf.mxu0
        %2485 = vmatprep.mubr.f32.mxu0 0.0
        %2486 = vmatmul.mubr.f32.gmra.mxu0 %v2321
        %v2487 = vpop.f32.mrf.mxu0
        %v2488 = vadd.f32 0.0, %v2487
        %v2489 = vpop.f32.mrf.mxu0
        %2490 = vmatprep.mubr.f32.mxu0 0.0
        %2491 = vmatmul.mubr.f32.gmra.mxu0 %v2323
        %v2492 = vpop.f32.mrf.mxu0
        %v2493 = vadd.f32 0.0, %v2492
        %v2494 = vpop.f32.mrf.mxu0
        %2495 = vmatprep.mubr.f32.mxu0 0.0
        %2496 = vmatmul.mubr.f32.gmra.mxu0 %v2325
        %v2497 = vpop.f32.mrf.mxu0
        %v2498 = vadd.f32 0.0, %v2497
        %v2499 = vpop.f32.mrf.mxu0
        %2500 = vmatprep.mubr.f32.mxu0 0.0
        %2501 = vmatmul.mubr.f32.gmra.mxu0 %v2327
        %v2502 = vpop.f32.mrf.mxu0
        %v2503 = vadd.f32 0.0, %v2502
        %v2504 = vpop.f32.mrf.mxu0
        %2505 = vmatprep.mubr.f32.mxu0 0.0
        %2506 = vmatmul.mubr.f32.gmra.mxu0 %v2329
        %v2507 = vpop.f32.mrf.mxu0
        %v2508 = vadd.f32 0.0, %v2507
        %v2509 = vpop.f32.mrf.mxu0
        %2510 = vmatprep.mubr.f32.mxu0 0.0
        %2511 = vmatmul.mubr.f32.gmra.mxu0 %v2331
        %v2512 = vpop.f32.mrf.mxu0
        %v2513 = vadd.f32 0.0, %v2512
        %v2514 = vpop.f32.mrf.mxu0
        %2515 = vmatprep.mubr.f32.mxu0 0.0
        %2516 = vmatmul.mubr.f32.gmra.mxu0 %v2333
        %v2517 = vpop.f32.mrf.mxu0
        %v2518 = vadd.f32 0.0, %v2517
        %v2519 = vpop.f32.mrf.mxu0
        %2520 = vmatprep.mubr.f32.mxu0 0.0
        %2521 = vmatmul.mubr.f32.gmra.mxu0 %v2335
        %v2522 = vpop.f32.mrf.mxu0
        %v2523 = vadd.f32 0.0, %v2522
        %v2524 = vpop.f32.mrf.mxu0
        %2525 = vmatprep.mubr.f32.mxu0 0.0
        %2526 = vmatmul.mubr.f32.gmra.mxu0 %v2337
        %v2527 = vpop.f32.mrf.mxu0
        %v2528 = vadd.f32 0.0, %v2527
        %v2529 = vpop.f32.mrf.mxu0
        %2530 = vmatprep.mubr.f32.mxu0 0.0
        %2531 = vmatmul.mubr.f32.gmra.mxu0 %v2339
        %v2532 = vpop.f32.mrf.mxu0
        %v2533 = vadd.f32 0.0, %v2532
        %v2534 = vpop.f32.mrf.mxu0
        %2535 = vmatprep.mubr.f32.mxu0 0.0
        %2536 = vmatmul.mubr.f32.gmra.mxu0 %v2341
        %v2537 = vpop.f32.mrf.mxu0
        %v2538 = vadd.f32 0.0, %v2537
        %v2539 = vpop.f32.mrf.mxu0
        %2540 = vmatprep.mubr.f32.mxu0 0.0
        %2541 = vmatmul.mubr.f32.gmra.mxu0 %v2343
        %v2542 = vpop.f32.mrf.mxu0
        %v2543 = vadd.f32 0.0, %v2542
        %v2544 = vpop.f32.mrf.mxu0
        %2545 = vmatprep.mubr.f32.mxu0 0.0
        %2546 = vmatmul.mubr.f32.gmra.mxu0 %v2345
        %v2547 = vpop.f32.mrf.mxu0
        %v2548 = vadd.f32 0.0, %v2547
        %v2549 = vpop.f32.mrf.mxu0
        %2550 = vmatprep.mubr.f32.mxu0 0.0
        %2551 = vmatmul.mubr.f32.gmra.mxu0 %v2347
        %v2552 = vpop.f32.mrf.mxu0
        %v2553 = vadd.f32 0.0, %v2552
        %v2554 = vpop.f32.mrf.mxu0
        %2555 = vmatprep.mubr.f32.mxu0 0.0
        %2556 = vmatmul.mubr.f32.gmra.mxu0 %v2349
        %v2557 = vpop.f32.mrf.mxu0
        %v2558 = vadd.f32 0.0, %v2557
        %v2559 = vpop.f32.mrf.mxu0
        %2560 = vmatprep.mubr.f32.mxu0 0.0
        %2561 = vmatmul.mubr.f32.gmra.mxu0 %v2351
        %v2562 = vpop.f32.mrf.mxu0
        %v2563 = vadd.f32 0.0, %v2562
        %v2564 = vpop.f32.mrf.mxu0
        %2565 = vmatprep.mubr.f32.mxu0 0.0
        %2566 = vmatmul.mubr.f32.gmra.mxu0 %v2353
        %v2567 = vpop.f32.mrf.mxu0
        %v2568 = vadd.f32 0.0, %v2567
        %v2569 = vpop.f32.mrf.mxu0
        %2570 = vmatprep.mubr.f32.mxu0 0.0
        %2571 = vmatmul.mubr.f32.gmra.mxu0 %v2355
        %v2572 = vpop.f32.mrf.mxu0
        %v2573 = vadd.f32 0.0, %v2572
        %v2574 = vpop.f32.mrf.mxu0
        %2575 = vmatprep.mubr.f32.mxu0 0.0
        %2576 = vmatmul.mubr.f32.gmra.mxu0 %v2357
        %v2577 = vpop.f32.mrf.mxu0
        %v2578 = vadd.f32 0.0, %v2577
        %v2579 = vpop.f32.mrf.mxu0
        %2580 = vmatprep.mubr.f32.mxu0 0.0
        %2581 = vmatmul.mubr.f32.gmra.mxu0 %v2359
        %v2582 = vpop.f32.mrf.mxu0
        %v2583 = vadd.f32 0.0, %v2582
        %v2584 = vpop.f32.mrf.mxu0
        %2585 = vdwg.mxu0
        %v2586 = vadd.f32 %v2199, %v2428
        %v2587 = vadd.f32 %v2200, %v2433
        %v2588 = vadd.f32 %v2201, %v2438
        %v2589 = vadd.f32 %v2202, %v2443
        %v2590 = vadd.f32 %v2203, %v2448
        %v2591 = vadd.f32 %v2204, %v2453
        %v2592 = vadd.f32 %v2205, %v2458
        %v2593 = vadd.f32 %v2206, %v2463
        %v2594 = vadd.f32 %v2207, %v2468
        %v2595 = vadd.f32 %v2208, %v2473
        %v2596 = vadd.f32 %v2209, %v2478
        %v2597 = vadd.f32 %v2210, %v2483
        %v2598 = vadd.f32 %v2211, %v2488
        %v2599 = vadd.f32 %v2212, %v2493
        %v2600 = vadd.f32 %v2213, %v2498
        %v2601 = vadd.f32 %v2214, %v2503
        %v2602 = vadd.f32 %v2215, %v2508
        %v2603 = vadd.f32 %v2216, %v2513
        %v2604 = vadd.f32 %v2217, %v2518
        %v2605 = vadd.f32 %v2218, %v2523
        %v2606 = vadd.f32 %v2219, %v2528
        %v2607 = vadd.f32 %v2220, %v2533
        %v2608 = vadd.f32 %v2221, %v2538
        %v2609 = vadd.f32 %v2222, %v2543
        %v2610 = vadd.f32 %v2223, %v2548
        %v2611 = vadd.f32 %v2224, %v2553
        %v2612 = vadd.f32 %v2225, %v2558
        %v2613 = vadd.f32 %v2226, %v2563
        %v2614 = vadd.f32 %v2227, %v2568
        %v2615 = vadd.f32 %v2228, %v2573
        %v2616 = vadd.f32 %v2229, %v2578
        %v2617 = vadd.f32 %v2230, %v2583
        %v2618 = vld [vmem:[%s3] sm:$0x1]
        %v2620 = vlaneseq
        %v2621 = vshrl.u32 %v2620, 7
        %v2622 = vsub.s32 0, %v2621
        %v2623 = vrot.slane %v2618, %v2622
        %v2625 = vadd.f32 %v2586, %v2623
        %v2626 = vadd.f32 %v2587, %v2623
        %v2627 = vadd.f32 %v2588, %v2623
        %v2628 = vadd.f32 %v2589, %v2623
        %v2629 = vadd.f32 %v2590, %v2623
        %v2630 = vadd.f32 %v2591, %v2623
        %v2631 = vadd.f32 %v2592, %v2623
        %v2632 = vadd.f32 %v2593, %v2623
        %v2633 = vadd.f32 %v2594, %v2623
        %v2634 = vadd.f32 %v2595, %v2623
        %v2635 = vadd.f32 %v2596, %v2623
        %v2636 = vadd.f32 %v2597, %v2623
        %v2637 = vadd.f32 %v2598, %v2623
        %v2638 = vadd.f32 %v2599, %v2623
        %v2639 = vadd.f32 %v2600, %v2623
        %v2640 = vadd.f32 %v2601, %v2623
        %v2641 = vadd.f32 %v2602, %v2623
        %v2642 = vadd.f32 %v2603, %v2623
        %v2643 = vadd.f32 %v2604, %v2623
        %v2644 = vadd.f32 %v2605, %v2623
        %v2645 = vadd.f32 %v2606, %v2623
        %v2646 = vadd.f32 %v2607, %v2623
        %v2647 = vadd.f32 %v2608, %v2623
        %v2648 = vadd.f32 %v2609, %v2623
        %v2649 = vadd.f32 %v2610, %v2623
        %v2650 = vadd.f32 %v2611, %v2623
        %v2651 = vadd.f32 %v2612, %v2623
        %v2652 = vadd.f32 %v2613, %v2623
        %v2653 = vadd.f32 %v2614, %v2623
        %v2654 = vadd.f32 %v2615, %v2623
        %v2655 = vadd.f32 %v2616, %v2623
        %v2656 = vadd.f32 %v2617, %v2623
        %v2657 = vmax.f32 %v2625, 0.0
        %v2658 = vmax.f32 %v2626, 0.0
        %v2659 = vmax.f32 %v2627, 0.0
        %v2660 = vmax.f32 %v2628, 0.0
        %v2661 = vmax.f32 %v2629, 0.0
        %v2662 = vmax.f32 %v2630, 0.0
        %v2663 = vmax.f32 %v2631, 0.0
        %v2664 = vmax.f32 %v2632, 0.0
        %v2665 = vmax.f32 %v2633, 0.0
        %v2666 = vmax.f32 %v2634, 0.0
        %v2667 = vmax.f32 %v2635, 0.0
        %v2668 = vmax.f32 %v2636, 0.0
        %v2669 = vmax.f32 %v2637, 0.0
        %v2670 = vmax.f32 %v2638, 0.0
        %v2671 = vmax.f32 %v2639, 0.0
        %v2672 = vmax.f32 %v2640, 0.0
        %v2673 = vmax.f32 %v2641, 0.0
        %v2674 = vmax.f32 %v2642, 0.0
        %v2675 = vmax.f32 %v2643, 0.0
        %v2676 = vmax.f32 %v2644, 0.0
        %v2677 = vmax.f32 %v2645, 0.0
        %v2678 = vmax.f32 %v2646, 0.0
        %v2679 = vmax.f32 %v2647, 0.0
        %v2680 = vmax.f32 %v2648, 0.0
        %v2681 = vmax.f32 %v2649, 0.0
        %v2682 = vmax.f32 %v2650, 0.0
        %v2683 = vmax.f32 %v2651, 0.0
        %v2684 = vmax.f32 %v2652, 0.0
        %v2685 = vmax.f32 %v2653, 0.0
        %v2686 = vmax.f32 %v2654, 0.0
        %v2687 = vmax.f32 %v2655, 0.0
        %v2688 = vmax.f32 %v2656, 0.0
        %v2689 = vld [vmem:[%s4] sm:$0xff]
        %v2690 = vld [vmem:[%s4 + $0x8] sm:$0xff]
        %v2691 = vmul.f32 %v2657, %v2689
        %v2692 = vmul.f32 %v2658, %v2690
        %v2693 = vmul.f32 %v2659, %v2689
        %v2694 = vmul.f32 %v2660, %v2690
        %v2695 = vmul.f32 %v2661, %v2689
        %v2696 = vmul.f32 %v2662, %v2690
        %v2697 = vmul.f32 %v2663, %v2689
        %v2698 = vmul.f32 %v2664, %v2690
        %v2699 = vmul.f32 %v2665, %v2689
        %v2700 = vmul.f32 %v2666, %v2690
        %v2701 = vmul.f32 %v2667, %v2689
        %v2702 = vmul.f32 %v2668, %v2690
        %v2703 = vmul.f32 %v2669, %v2689
        %v2704 = vmul.f32 %v2670, %v2690
        %v2705 = vmul.f32 %v2671, %v2689
        %v2706 = vmul.f32 %v2672, %v2690
        %v2707 = vmul.f32 %v2673, %v2689
        %v2708 = vmul.f32 %v2674, %v2690
        %v2709 = vmul.f32 %v2675, %v2689
        %v2710 = vmul.f32 %v2676, %v2690
        %v2711 = vmul.f32 %v2677, %v2689
        %v2712 = vmul.f32 %v2678, %v2690
        %v2713 = vmul.f32 %v2679, %v2689
        %v2714 = vmul.f32 %v2680, %v2690
        %v2715 = vmul.f32 %v2681, %v2689
        %v2716 = vmul.f32 %v2682, %v2690
        %v2717 = vmul.f32 %v2683, %v2689
        %v2718 = vmul.f32 %v2684, %v2690
        %v2719 = vmul.f32 %v2685, %v2689
        %v2720 = vmul.f32 %v2686, %v2690
        %v2721 = vmul.f32 %v2687, %v2689
        %v2722 = vmul.f32 %v2688, %v2690
        %v2723 = vmax.f32 %v2691, %v2692
        %v2724 = vrot.slane %v2723, 4
        %v2725 = vmax.f32 %v2723, %v2724
        %v2726 = vrot.slane %v2725, 2
        %v2727 = vmax.f32 %v2725, %v2726
        %v2728 = vrot.slane %v2727, 1
        %v2729 = vmax.f32 %v2727, %v2728
        %v2730 = vmax.f32 %v2693, %v2694
        %v2731 = vrot.slane %v2730, 4
        %v2732 = vmax.f32 %v2730, %v2731
        %v2733 = vrot.slane %v2732, 2
        %v2734 = vmax.f32 %v2732, %v2733
        %v2735 = vrot.slane %v2734, 1
        %v2736 = vmax.f32 %v2734, %v2735
        %v2737 = vmax.f32 %v2695, %v2696
        %v2738 = vrot.slane %v2737, 4
        %v2739 = vmax.f32 %v2737, %v2738
        %v2740 = vrot.slane %v2739, 2
        %v2741 = vmax.f32 %v2739, %v2740
        %v2742 = vrot.slane %v2741, 1
        %v2743 = vmax.f32 %v2741, %v2742
        %v2744 = vmax.f32 %v2697, %v2698
        %v2745 = vrot.slane %v2744, 4
        %v2746 = vmax.f32 %v2744, %v2745
        %v2747 = vrot.slane %v2746, 2
        %v2748 = vmax.f32 %v2746, %v2747
        %v2749 = vrot.slane %v2748, 1
        %v2750 = vmax.f32 %v2748, %v2749
        %v2751 = vmax.f32 %v2699, %v2700
        %v2752 = vrot.slane %v2751, 4
        %v2753 = vmax.f32 %v2751, %v2752
        %v2754 = vrot.slane %v2753, 2
        %v2755 = vmax.f32 %v2753, %v2754
        %v2756 = vrot.slane %v2755, 1
        %v2757 = vmax.f32 %v2755, %v2756
        %v2758 = vmax.f32 %v2701, %v2702
        %v2759 = vrot.slane %v2758, 4
        %v2760 = vmax.f32 %v2758, %v2759
        %v2761 = vrot.slane %v2760, 2
        %v2762 = vmax.f32 %v2760, %v2761
        %v2763 = vrot.slane %v2762, 1
        %v2764 = vmax.f32 %v2762, %v2763
        %v2765 = vmax.f32 %v2703, %v2704
        %v2766 = vrot.slane %v2765, 4
        %v2767 = vmax.f32 %v2765, %v2766
        %v2768 = vrot.slane %v2767, 2
        %v2769 = vmax.f32 %v2767, %v2768
        %v2770 = vrot.slane %v2769, 1
        %v2771 = vmax.f32 %v2769, %v2770
        %v2772 = vmax.f32 %v2705, %v2706
        %v2773 = vrot.slane %v2772, 4
        %v2774 = vmax.f32 %v2772, %v2773
        %v2775 = vrot.slane %v2774, 2
        %v2776 = vmax.f32 %v2774, %v2775
        %v2777 = vrot.slane %v2776, 1
        %v2778 = vmax.f32 %v2776, %v2777
        %v2779 = vmax.f32 %v2707, %v2708
        %v2780 = vrot.slane %v2779, 4
        %v2781 = vmax.f32 %v2779, %v2780
        %v2782 = vrot.slane %v2781, 2
        %v2783 = vmax.f32 %v2781, %v2782
        %v2784 = vrot.slane %v2783, 1
        %v2785 = vmax.f32 %v2783, %v2784
        %v2786 = vmax.f32 %v2709, %v2710
        %v2787 = vrot.slane %v2786, 4
        %v2788 = vmax.f32 %v2786, %v2787
        %v2789 = vrot.slane %v2788, 2
        %v2790 = vmax.f32 %v2788, %v2789
        %v2791 = vrot.slane %v2790, 1
        %v2792 = vmax.f32 %v2790, %v2791
        %v2793 = vmax.f32 %v2711, %v2712
        %v2794 = vrot.slane %v2793, 4
        %v2795 = vmax.f32 %v2793, %v2794
        %v2796 = vrot.slane %v2795, 2
        %v2797 = vmax.f32 %v2795, %v2796
        %v2798 = vrot.slane %v2797, 1
        %v2799 = vmax.f32 %v2797, %v2798
        %v2800 = vmax.f32 %v2713, %v2714
        %v2801 = vrot.slane %v2800, 4
        %v2802 = vmax.f32 %v2800, %v2801
        %v2803 = vrot.slane %v2802, 2
        %v2804 = vmax.f32 %v2802, %v2803
        %v2805 = vrot.slane %v2804, 1
        %v2806 = vmax.f32 %v2804, %v2805
        %v2807 = vmax.f32 %v2715, %v2716
        %v2808 = vrot.slane %v2807, 4
        %v2809 = vmax.f32 %v2807, %v2808
        %v2810 = vrot.slane %v2809, 2
        %v2811 = vmax.f32 %v2809, %v2810
        %v2812 = vrot.slane %v2811, 1
        %v2813 = vmax.f32 %v2811, %v2812
        %v2814 = vmax.f32 %v2717, %v2718
        %v2815 = vrot.slane %v2814, 4
        %v2816 = vmax.f32 %v2814, %v2815
        %v2817 = vrot.slane %v2816, 2
        %v2818 = vmax.f32 %v2816, %v2817
        %v2819 = vrot.slane %v2818, 1
        %v2820 = vmax.f32 %v2818, %v2819
        %v2821 = vmax.f32 %v2719, %v2720
        %v2822 = vrot.slane %v2821, 4
        %v2823 = vmax.f32 %v2821, %v2822
        %v2824 = vrot.slane %v2823, 2
        %v2825 = vmax.f32 %v2823, %v2824
        %v2826 = vrot.slane %v2825, 1
        %v2827 = vmax.f32 %v2825, %v2826
        %v2828 = vmax.f32 %v2721, %v2722
        %v2829 = vrot.slane %v2828, 4
        %v2830 = vmax.f32 %v2828, %v2829
        %v2831 = vrot.slane %v2830, 2
        %v2832 = vmax.f32 %v2830, %v2831
        %v2833 = vrot.slane %v2832, 1
        %v2834 = vmax.f32 %v2832, %v2833
        %v2835 = vld [vmem:[%s5] sm:$0xff]
        %v2836 = vld [vmem:[%s5 + $0x8] sm:$0xff]
        %v2837 = vld [vmem:[%s5 + $0x10] sm:$0xff]
        %v2838 = vld [vmem:[%s5 + $0x18] sm:$0xff]
        %v2839 = vld [vmem:[%s5 + $0x20] sm:$0xff]
        %v2840 = vld [vmem:[%s5 + $0x28] sm:$0xff]
        %v2841 = vld [vmem:[%s5 + $0x30] sm:$0xff]
        %v2842 = vld [vmem:[%s5 + $0x38] sm:$0xff]
        %v2843 = vld [vmem:[%s5 + $0x40] sm:$0xff]
        %v2844 = vld [vmem:[%s5 + $0x48] sm:$0xff]
        %v2845 = vld [vmem:[%s5 + $0x50] sm:$0xff]
        %v2846 = vld [vmem:[%s5 + $0x58] sm:$0xff]
        %v2847 = vld [vmem:[%s5 + $0x60] sm:$0xff]
        %v2848 = vld [vmem:[%s5 + $0x68] sm:$0xff]
        %v2849 = vld [vmem:[%s5 + $0x70] sm:$0xff]
        %v2850 = vld [vmem:[%s5 + $0x78] sm:$0xff]
        %v2851 = vld [vmem:[%s6] sm:$0x1]
        %v2853 = vlaneseq
        %v2854 = vshrl.u32 %v2853, 7
        %v2855 = vsub.s32 0, %v2854
        %v2856 = vrot.slane %v2851, %v2855
        %vm2874 = vcmask 1041409
        %v2875 = vsel %vm2874, %v2736, %v2729
        %vm2876 = vcmask 1042434
        %v2877 = vsel %vm2876, %v2743, %v2875
        %vm2878 = vcmask 1043459
        %v2879 = vsel %vm2878, %v2750, %v2877
        %vm2880 = vcmask 1044484
        %v2881 = vsel %vm2880, %v2757, %v2879
        %vm2882 = vcmask 1045509
        %v2883 = vsel %vm2882, %v2764, %v2881
        %vm2884 = vcmask 1046534
        %v2885 = vsel %vm2884, %v2771, %v2883
        %vm2886 = vcmask 1047559
        %v2887 = vsel %vm2886, %v2778, %v2885
        %v2888 = vsel %vm2874, %v2792, %v2785
        %v2889 = vsel %vm2876, %v2799, %v2888
        %v2890 = vsel %vm2878, %v2806, %v2889
        %v2891 = vsel %vm2880, %v2813, %v2890
        %v2892 = vsel %vm2882, %v2820, %v2891
        %v2893 = vsel %vm2884, %v2827, %v2892
        %v2894 = vsel %vm2886, %v2834, %v2893
        %2897 = vmatprep.subr.mxu0 0.0
        %2898 = vmatpush1.msra.mxu0 %v2850
        %2899 = vmatprep.subr.mxu0 0.0
        %2900 = vmatpush1.msra.mxu0 %v2849
        %2901 = vmatprep.subr.mxu0 0.0
        %2902 = vmatpush1.msra.mxu0 %v2848
        %2903 = vmatprep.subr.mxu0 0.0
        %2904 = vmatpush1.msra.mxu0 %v2847
        %2905 = vmatprep.subr.mxu0 0.0
        %2906 = vmatpush1.msra.mxu0 %v2846
        %2907 = vmatprep.subr.mxu0 0.0
        %2908 = vmatpush1.msra.mxu0 %v2845
        %2909 = vmatprep.subr.mxu0 0.0
        %2910 = vmatpush1.msra.mxu0 %v2844
        %2911 = vmatprep.subr.mxu0 0.0
        %2912 = vmatpush1.msra.mxu0 %v2843
        %2913 = vmatprep.subr.mxu0 0.0
        %2914 = vmatpush1.msra.mxu0 %v2842
        %2915 = vmatprep.subr.mxu0 0.0
        %2916 = vmatpush1.msra.mxu0 %v2841
        %2917 = vmatprep.subr.mxu0 0.0
        %2918 = vmatpush1.msra.mxu0 %v2840
        %2919 = vmatprep.subr.mxu0 0.0
        %2920 = vmatpush1.msra.mxu0 %v2839
        %2921 = vmatprep.subr.mxu0 0.0
        %2922 = vmatpush1.msra.mxu0 %v2838
        %2923 = vmatprep.subr.mxu0 0.0
        %2924 = vmatpush1.msra.mxu0 %v2837
        %2925 = vmatprep.subr.mxu0 0.0
        %2926 = vmatpush1.msra.mxu0 %v2836
        %2927 = vmatprep.subr.mxu0 0.0
        %2928 = vmatpush1.msra.mxu0 %v2835
        %2929 = vmatprep.subr.mxu0 0.0
        %2930 = vmatpush2.msra.mxu0 0.0
        %2931 = vmatprep.subr.mxu0 0.0
        %2932 = vmatpush2.msra.mxu0 0.0
        %2933 = vmatprep.subr.mxu0 0.0
        %2934 = vmatpush2.msra.mxu0 0.0
        %2935 = vmatprep.subr.mxu0 0.0
        %2936 = vmatpush2.msra.mxu0 0.0
        %2937 = vmatprep.subr.mxu0 0.0
        %2938 = vmatpush2.msra.mxu0 0.0
        %2939 = vmatprep.subr.mxu0 0.0
        %2940 = vmatpush2.msra.mxu0 0.0
        %2941 = vmatprep.subr.mxu0 0.0
        %2942 = vmatpush2.msra.mxu0 0.0
        %2943 = vmatprep.subr.mxu0 0.0
        %2944 = vmatpush2.msra.mxu0 0.0
        %2945 = vmatprep.subr.mxu0 0.0
        %2946 = vmatpush2.msra.mxu0 0.0
        %2947 = vmatprep.subr.mxu0 0.0
        %2948 = vmatpush2.msra.mxu0 0.0
        %2949 = vmatprep.subr.mxu0 0.0
        %2950 = vmatpush2.msra.mxu0 0.0
        %2951 = vmatprep.subr.mxu0 0.0
        %2952 = vmatpush2.msra.mxu0 0.0
        %2953 = vmatprep.subr.mxu0 0.0
        %2954 = vmatpush2.msra.mxu0 0.0
        %2955 = vmatprep.subr.mxu0 0.0
        %2956 = vmatpush2.msra.mxu0 0.0
        %2957 = vmatprep.subr.mxu0 0.0
        %2958 = vmatpush2.msra.mxu0 0.0
        %2959 = vmatprep.subr.mxu0 0.0
        %2960 = vmatpush2.msra.mxu0 0.0
        %2961 = vmatprep.mubr.f32.mxu0 0.0
        %2962 = vmatmul.mubr.f32.gmra.mxu0 %v2887
        %v2963 = vpop.f32.mrf.mxu0
        %v2964 = vadd.f32 %v2856, %v2963
        %v2965 = vpop.f32.mrf.mxu0
        %2966 = vmatprep.mubr.f32.mxu0 0.0
        %2967 = vmatmul.mubr.f32.gmra.mxu0 %v2894
        %v2968 = vpop.f32.mrf.mxu0
        %v2969 = vadd.f32 %v2856, %v2968
        %v2970 = vpop.f32.mrf.mxu0
        %2971 = vdwg.mxu0
        %2972 = vst [vmem:[%s272] sm:$0xff] %v2964
        %2973 = vst [vmem:[%s272 + $0x8] sm:$0xff] %v2969
        %s2974 = sand.u32 %s181, 1
        %s2975 = scalar_lea.sflag [#allocation3], %s2974
        %s2976 = sand.u32 %s181, 1
        %s2977 = smul.addr %s2976, 16
        %s2978 = scalar_lea.vmem [#allocation2], %s2977
        // Predicated region
        $region49: #{tpu_custom_call.1} parent=47 // pred_check
          %p2979 = pneg %p191
        $region50: #{tpu_custom_call.1} parent=47 // pred_check_branch
          %2981 = sbr.rel (%p2979) target = $region52
        $region51: #{tpu_custom_call.1} parent=47 // pred_region
          %s2982 = smul.u32 2, %s21
          %s2984 = ssub.s32 256, 256
          %2985 = vsyncadd %s2975, %s2984
          %s2986 = smul.addr %s2982, 128
          %s2987 = scalar_lea.hbm %s7, %s2986
          %s2988 = sshll.u32 %s2978, 4
          %s2989 = int_to_ptr.vmem [resolvable:$true] %s2988
          %2994 = dma.vmem_to_hbm [thread:$0]  %s2989, 256, %s2987, %s2975, 128, 128, 8
        $region52: #{tpu_custom_call.1} parent=47 // pred_fallthru
          _
      $region48: #{tpu_custom_call.1} parent=5 // pred_fallthru
        _
      %p2995 = scmp.le.s32.totalorder 2, %s16
      // Predicated region
      $region53: #{tpu_custom_call.1} parent=5 // pred_check
        %p2996 = pneg %p2995
      $region54: #{tpu_custom_call.1} parent=5 // pred_check_branch
        %2998 = sbr.rel (%p2996) target = $region56
      $region55: #{tpu_custom_call.1} parent=5 // pred_region
        %s2999 = ssub.s32 %s16, 2
        // Predicated region
        $region57: #{tpu_custom_call.1} parent=55 // pred_check
          %p3000 = pneg %p197
        $region58: #{tpu_custom_call.1} parent=55 // pred_check_branch
          %3002 = sbr.rel (%p3000) target = $region60
        $region59: #{tpu_custom_call.1} parent=55 // pred_region
          %s3003 = sand.u32 %s182, 1
          %s3004 = scalar_lea.sflag [#allocation3], %s3003
          %s3005 = sand.u32 %s182, 1
          %s3006 = smul.addr %s3005, 16
          %s3007 = scalar_lea.vmem [#allocation2], %s3006
          %3008 = dma.done %s3004, 256
        $region60: #{tpu_custom_call.1} parent=55 // pred_fallthru
          _
      $region56: #{tpu_custom_call.1} parent=5 // pred_fallthru
        _
    $region6: #{tpu_custom_call.1} parent=1 // loop_footer
      %s20 = sadd.s32 1, %s16
    $region7: #{tpu_custom_call.1} parent=1 // loop_footer_branch
      %15 = sbr.rel target = $region3
    $region8: #{tpu_custom_call.1} parent=1 // loop_exit
      _
    %3009 = vsyncpa [#allocation3], 1
    %s3010 = scalar_lea.sflag [#allocation3], 1
    %3011 = vsyncpa %s3010, 1

</llo_original>
